<compile_context>
chip_gen: v7x
topology: tpu7x:2x2x1
jax: 0.10.0
libtpu: 0.0.40
codegen_flags: <defaults>
</compile_context>

<pallas_src>
import jax
import jax.numpy as jnp
from jax.experimental import pallas as pl
from jax.experimental.pallas import tpu as pltpu


def _rup(x, m):
    return (x + m - 1) // m * m


def basic_conv2d(x_nchw, weight, bias, gamma, beta, running_mean, running_var,
                 *, padding=0, eps=1e-3):
    N, C, H, W = x_nchw.shape
    O, _, kh, kw = weight.shape
    Hp, Wp = H + 2 * padding, W + 2 * padding
    Ho, Wo = Hp - kh + 1, Wp - kw + 1

    LANE, SUB = 128, 8
    KT = kh * kw
    O8 = _rup(O, SUB)                       # out channels padded to a sublane multiple
    Mprime = Ho * Wp                        # over-wide flat output grid (Ho x Wp)
    HALO = (kh - 1) * Wp + (kw - 1)         # extra flat elements a tile reads past its end
    HB = _rup(HALO, LANE)                   # halo block width (lane multiple)

    # Spatial tile width (lane dim).  Larger tiles amortize per-step overhead; 512 keeps
    # per-step VMEM tiny even at Inception-sized C (v5e/v6e could use 1024, v7x <= 512).
    TM = min(512, _rup(Mprime, LANE))
    TM = max(TM, LANE)
    TM = _rup(TM, HB)                       # halo block index (t+1)*TM/HB must be integral
    R = TM // HB
    Mp = _rup(Mprime, TM)
    T = Mp // TM
    Lpad = _rup(max(Hp * Wp, Mp + HB), TM)

    # ---- glue: pad + flatten the input (NO im2col materialization), bf16 for DMA ----
    xp = jnp.pad(x_nchw.astype(jnp.float32),
                 ((0, 0), (0, 0), (padding, padding), (padding, padding)))
    x_flat = xp.reshape(N, C, Hp * Wp)
    x_flat = jnp.pad(x_flat, ((0, 0), (0, 0), (0, Lpad - Hp * Wp)))
    x_flat = x_flat.astype(jnp.bfloat16)                              # (N, C, Lpad)

    # ---- one-time BN constant folding into weights / shift (tiny tensors, f32) ----
    scale = gamma / jnp.sqrt(running_var + eps)                       # (O,)
    w_f = weight.astype(jnp.float32) * scale[:, None, None, None]     # (O, C, kh, kw)
    w_taps = jnp.transpose(w_f, (2, 3, 0, 1)).reshape(KT, O, C)       # (kh*kw, O, C)
    w_taps = jnp.pad(w_taps, ((0, 0), (0, O8 - O), (0, 0)))
    shift = (bias - running_mean) * scale + beta                      # (O,)
    shift_col = jnp.pad(shift, (0, O8 - O)).reshape(O8, 1).astype(jnp.float32)

    # Flat offset of tap (di, dj) relative to the output position (stride 1).
    offs = [di * Wp + dj for di in range(kh) for dj in range(kw)]

    def kernel(xb_ref, xh_ref, w_ref, s_ref, o_ref):
        # xb_ref: (1, C, TM)   body tile of the flattened padded image (bf16)
        # xh_ref: (1, C, HB)   halo immediately following the body tile (bf16)
        # w_ref:  (KT, O8, C)  BN-folded weights, one (O8, C) matrix per tap (f32)
        # s_ref:  (O8, 1)      (conv_bias - mean) * scale + beta (f32)
        # o_ref:  (1, O8, TM)  lane-dense output tile (bf16)
        body = xb_ref[0].astype(jnp.float32)
        halo = xh_ref[0].astype(jnp.float32)
        win = jnp.concatenate([body, halo], axis=-1)                  # (C, TM + HB)
        acc = jnp.zeros((O8, TM), jnp.float32)
        for tap, off in enumerate(offs):                              # in-kernel im2col
            acc = acc + jnp.dot(w_ref[tap], win[:, off:off + TM],
                                preferred_element_type=jnp.float32)
        y = jnp.maximum(acc + s_ref[...], 0.0)                        # fused shift + ReLU
        o_ref[0] = y.astype(o_ref.dtype)

    out = pl.pallas_call(
        kernel,
        out_shape=jax.ShapeDtypeStruct((N, O8, Mp), jnp.bfloat16),
        grid_spec=pltpu.PrefetchScalarGridSpec(
            num_scalar_prefetch=0,
            grid=(N, T),
            in_specs=[
                pl.BlockSpec((1, C, TM), lambda n, t: (n, 0, t)),
                pl.BlockSpec((1, C, HB), lambda n, t: (n, 0, (t + 1) * R)),
                # Resident operands (constant index maps).  Tiny at this shape; at
                # Inception scale mark them pipeline_mode=pl.Buffered(1) to drop the
                # useless second pipeline buffer and free VMEM for a larger TM.
                pl.BlockSpec((KT, O8, C), lambda n, t: (0, 0, 0)),
                pl.BlockSpec((O8, 1), lambda n, t: (0, 0)),
            ],
            out_specs=pl.BlockSpec((1, O8, TM), lambda n, t: (n, 0, t)),
        ),
        compiler_params=pltpu.CompilerParams(
            dimension_semantics=("parallel", "parallel"),   # batch x row-tiles (>= 2 steps)
            vmem_limit_bytes=48 << 20,                      # headroom on v7x's 64 MiB VMEM
        ),
    )(x_flat, x_flat, w_taps, shift_col)

    # ---- glue: drop channel/spatial padding + garbage columns; already NCHW ----
    out = out[:, :O, :Mprime].reshape(N, O, Ho, Wp)[:, :, :, :Wo]
    return out.astype(jnp.float32)


def _reference(x, weight, bias, gamma, beta, mean, var, padding, eps):
    y = jax.lax.conv_general_dilated(
        x, weight, window_strides=(1, 1),
        padding=((padding, padding), (padding, padding)),
        dimension_numbers=('NCHW', 'OIHW', 'NCHW'))
    y = y + bias[None, :, None, None]
    y = (y - mean[None, :, None, None]) / jnp.sqrt(var[None, :, None, None] + eps)
    y = y * gamma[None, :, None, None] + beta[None, :, None, None]
    return jnp.maximum(y, 0.0)


if __name__ == "__main__":
    # BasicConv2d(in_channels=4, out_channels=8, kernel_size=3, padding=1)
    N, C_in, H, W = 2, 4, 16, 16
    C_out, ksize, padding, eps = 8, 3, 1, 1e-3

    key = jax.random.PRNGKey(0)
    k_x, k_w, k_b, k_g, k_be, k_m, k_v = jax.random.split(key, 7)

    x = jax.random.normal(k_x, (N, C_in, H, W), dtype=jnp.float32)
    weight = 0.1 * jax.random.normal(k_w, (C_out, C_in, ksize, ksize), dtype=jnp.float32)
    bias = 0.1 * jax.random.normal(k_b, (C_out,), dtype=jnp.float32)
    gamma = 1.0 + 0.1 * jax.random.normal(k_g, (C_out,), dtype=jnp.float32)
    beta = 0.1 * jax.random.normal(k_be, (C_out,), dtype=jnp.float32)
    running_mean = 0.1 * jax.random.normal(k_m, (C_out,), dtype=jnp.float32)
    running_var = 0.5 + jnp.abs(jax.random.normal(k_v, (C_out,), dtype=jnp.float32))

    out = basic_conv2d(x, weight, bias, gamma, beta, running_mean, running_var,
                       padding=padding, eps=eps)
    out = jax.block_until_ready(out)

    ref = _reference(x, weight, bias, gamma, beta, running_mean, running_var,
                     padding, eps)
    assert out.shape == (N, C_out, H, W), out.shape
    max_err = float(jnp.max(jnp.abs(out - ref)))
    # bf16 activation DMA + bf16 writeback (f32 accumulation) -> relaxed tolerance.
    assert jnp.allclose(out, ref, atol=3e-2, rtol=3e-2), max_err

    print("KERNEL_OK")
</pallas_src>

<mosaic_0001>
module attributes {stable_mosaic.version = 11 : i64} {
  func.func @kernel(%arg0: i32, %arg1: i32, %arg2: memref<1x4x384xbf16, #tpu.memory_space<vmem>>, %arg3: memref<1x4x128xbf16, #tpu.memory_space<vmem>>, %arg4: memref<9x8x4xf32, #tpu.memory_space<vmem>>, %arg5: memref<8x1xf32, #tpu.memory_space<vmem>>, %arg6: memref<1x8x384xbf16, #tpu.memory_space<vmem>>) attributes {dimension_semantics = [#tpu.dimension_semantics<parallel>, #tpu.dimension_semantics<parallel>], iteration_bounds = array<i64: 2, 1>, scalar_prefetch = 0 : i64, scratch_operands = 0 : i64, tpu.core_type = #tpu.core_type<tc>, window_params = [{transform_indices = @transform_0, window_bounds = array<i64: 1, 4, 384>}, {transform_indices = @transform_1, window_bounds = array<i64: 1, 4, 128>}, {pipeline_mode = #tpu.pipeline_mode<synchronous>, transform_indices = @transform_2, window_bounds = array<i64: 9, 8, 4>}, {pipeline_mode = #tpu.pipeline_mode<synchronous>, transform_indices = @transform_3, window_bounds = array<i64: 8, 1>}, {transform_indices = @transform_4, window_bounds = array<i64: 1, 8, 384>}]} {
    %c0 = arith.constant 0 : index
    %c0_0 = arith.constant 0 : index
    %c0_1 = arith.constant 0 : index
    %0 = vector.load %arg2[%c0, %c0_0, %c0_1] : memref<1x4x384xbf16, #tpu.memory_space<vmem>>, vector<1x4x384xbf16>
    %1 = vector.shape_cast %0 : vector<1x4x384xbf16> to vector<4x384xbf16>
    %2 = arith.extf %1 : vector<4x384xbf16> to vector<4x384xf32>
    %c0_2 = arith.constant 0 : index
    %c0_3 = arith.constant 0 : index
    %c0_4 = arith.constant 0 : index
    %3 = vector.load %arg3[%c0_2, %c0_3, %c0_4] : memref<1x4x128xbf16, #tpu.memory_space<vmem>>, vector<1x4x128xbf16>
    %4 = vector.shape_cast %3 : vector<1x4x128xbf16> to vector<4x128xbf16>
    %5 = arith.extf %4 : vector<4x128xbf16> to vector<4x128xf32>
    %6 = tpu.concatenate %2, %5 in 1 : vector<4x384xf32>, vector<4x128xf32> -> vector<4x512xf32>
    %cst = arith.constant 0.000000e+00 : f32
    %7 = vector.broadcast %cst : f32 to vector<8x384xf32>
    %c0_5 = arith.constant 0 : index
    %c0_6 = arith.constant 0 : index
    %c0_7 = arith.constant 0 : index
    %8 = vector.load %arg4[%c0_5, %c0_6, %c0_7] : memref<9x8x4xf32, #tpu.memory_space<vmem>>, vector<1x8x4xf32>
    %9 = vector.shape_cast %8 : vector<1x8x4xf32> to vector<8x4xf32>
    %10 = vector.extract_strided_slice %6 {offsets = [0, 0], sizes = [4, 384], strides = [1, 1]} : vector<4x512xf32> to vector<4x384xf32>
    %cst_8 = arith.constant dense<0.000000e+00> : vector<8x384xf32>
    %11 = tpu.matmul %9, %10, %cst_8 {dimension_numbers = #tpu.dot_dimension_numbers<[1], [0], [0], [1], [0, 0, 1, 1], [], []>} : vector<8x4xf32>, vector<4x384xf32>, vector<8x384xf32> -> vector<8x384xf32>
    %12 = arith.addf %7, %11 : vector<8x384xf32>
    %c1 = arith.constant 1 : index
    %c0_9 = arith.constant 0 : index
    %c0_10 = arith.constant 0 : index
    %13 = vector.load %arg4[%c1, %c0_9, %c0_10] : memref<9x8x4xf32, #tpu.memory_space<vmem>>, vector<1x8x4xf32>
    %14 = vector.shape_cast %13 : vector<1x8x4xf32> to vector<8x4xf32>
    %15 = vector.extract_strided_slice %6 {offsets = [0, 1], sizes = [4, 384], strides = [1, 1]} : vector<4x512xf32> to vector<4x384xf32>
    %cst_11 = arith.constant dense<0.000000e+00> : vector<8x384xf32>
    %16 = tpu.matmul %14, %15, %cst_11 {dimension_numbers = #tpu.dot_dimension_numbers<[1], [0], [0], [1], [0, 0, 1, 1], [], []>} : vector<8x4xf32>, vector<4x384xf32>, vector<8x384xf32> -> vector<8x384xf32>
    %17 = arith.addf %12, %16 : vector<8x384xf32>
    %c2 = arith.constant 2 : index
    %c0_12 = arith.constant 0 : index
    %c0_13 = arith.constant 0 : index
    %18 = vector.load %arg4[%c2, %c0_12, %c0_13] : memref<9x8x4xf32, #tpu.memory_space<vmem>>, vector<1x8x4xf32>
    %19 = vector.shape_cast %18 : vector<1x8x4xf32> to vector<8x4xf32>
    %20 = vector.extract_strided_slice %6 {offsets = [0, 2], sizes = [4, 384], strides = [1, 1]} : vector<4x512xf32> to vector<4x384xf32>
    %cst_14 = arith.constant dense<0.000000e+00> : vector<8x384xf32>
    %21 = tpu.matmul %19, %20, %cst_14 {dimension_numbers = #tpu.dot_dimension_numbers<[1], [0], [0], [1], [0, 0, 1, 1], [], []>} : vector<8x4xf32>, vector<4x384xf32>, vector<8x384xf32> -> vector<8x384xf32>
    %22 = arith.addf %17, %21 : vector<8x384xf32>
    %c3 = arith.constant 3 : index
    %c0_15 = arith.constant 0 : index
    %c0_16 = arith.constant 0 : index
    %23 = vector.load %arg4[%c3, %c0_15, %c0_16] : memref<9x8x4xf32, #tpu.memory_space<vmem>>, vector<1x8x4xf32>
    %24 = vector.shape_cast %23 : vector<1x8x4xf32> to vector<8x4xf32>
    %25 = vector.extract_strided_slice %6 {offsets = [0, 18], sizes = [4, 384], strides = [1, 1]} : vector<4x512xf32> to vector<4x384xf32>
    %cst_17 = arith.constant dense<0.000000e+00> : vector<8x384xf32>
    %26 = tpu.matmul %24, %25, %cst_17 {dimension_numbers = #tpu.dot_dimension_numbers<[1], [0], [0], [1], [0, 0, 1, 1], [], []>} : vector<8x4xf32>, vector<4x384xf32>, vector<8x384xf32> -> vector<8x384xf32>
    %27 = arith.addf %22, %26 : vector<8x384xf32>
    %c4 = arith.constant 4 : index
    %c0_18 = arith.constant 0 : index
    %c0_19 = arith.constant 0 : index
    %28 = vector.load %arg4[%c4, %c0_18, %c0_19] : memref<9x8x4xf32, #tpu.memory_space<vmem>>, vector<1x8x4xf32>
    %29 = vector.shape_cast %28 : vector<1x8x4xf32> to vector<8x4xf32>
    %30 = vector.extract_strided_slice %6 {offsets = [0, 19], sizes = [4, 384], strides = [1, 1]} : vector<4x512xf32> to vector<4x384xf32>
    %cst_20 = arith.constant dense<0.000000e+00> : vector<8x384xf32>
    %31 = tpu.matmul %29, %30, %cst_20 {dimension_numbers = #tpu.dot_dimension_numbers<[1], [0], [0], [1], [0, 0, 1, 1], [], []>} : vector<8x4xf32>, vector<4x384xf32>, vector<8x384xf32> -> vector<8x384xf32>
    %32 = arith.addf %27, %31 : vector<8x384xf32>
    %c5 = arith.constant 5 : index
    %c0_21 = arith.constant 0 : index
    %c0_22 = arith.constant 0 : index
    %33 = vector.load %arg4[%c5, %c0_21, %c0_22] : memref<9x8x4xf32, #tpu.memory_space<vmem>>, vector<1x8x4xf32>
    %34 = vector.shape_cast %33 : vector<1x8x4xf32> to vector<8x4xf32>
    %35 = vector.extract_strided_slice %6 {offsets = [0, 20], sizes = [4, 384], strides = [1, 1]} : vector<4x512xf32> to vector<4x384xf32>
    %cst_23 = arith.constant dense<0.000000e+00> : vector<8x384xf32>
    %36 = tpu.matmul %34, %35, %cst_23 {dimension_numbers = #tpu.dot_dimension_numbers<[1], [0], [0], [1], [0, 0, 1, 1], [], []>} : vector<8x4xf32>, vector<4x384xf32>, vector<8x384xf32> -> vector<8x384xf32>
    %37 = arith.addf %32, %36 : vector<8x384xf32>
    %c6 = arith.constant 6 : index
    %c0_24 = arith.constant 0 : index
    %c0_25 = arith.constant 0 : index
    %38 = vector.load %arg4[%c6, %c0_24, %c0_25] : memref<9x8x4xf32, #tpu.memory_space<vmem>>, vector<1x8x4xf32>
    %39 = vector.shape_cast %38 : vector<1x8x4xf32> to vector<8x4xf32>
    %40 = vector.extract_strided_slice %6 {offsets = [0, 36], sizes = [4, 384], strides = [1, 1]} : vector<4x512xf32> to vector<4x384xf32>
    %cst_26 = arith.constant dense<0.000000e+00> : vector<8x384xf32>
    %41 = tpu.matmul %39, %40, %cst_26 {dimension_numbers = #tpu.dot_dimension_numbers<[1], [0], [0], [1], [0, 0, 1, 1], [], []>} : vector<8x4xf32>, vector<4x384xf32>, vector<8x384xf32> -> vector<8x384xf32>
    %42 = arith.addf %37, %41 : vector<8x384xf32>
    %c7 = arith.constant 7 : index
    %c0_27 = arith.constant 0 : index
    %c0_28 = arith.constant 0 : index
    %43 = vector.load %arg4[%c7, %c0_27, %c0_28] : memref<9x8x4xf32, #tpu.memory_space<vmem>>, vector<1x8x4xf32>
    %44 = vector.shape_cast %43 : vector<1x8x4xf32> to vector<8x4xf32>
    %45 = vector.extract_strided_slice %6 {offsets = [0, 37], sizes = [4, 384], strides = [1, 1]} : vector<4x512xf32> to vector<4x384xf32>
    %cst_29 = arith.constant dense<0.000000e+00> : vector<8x384xf32>
    %46 = tpu.matmul %44, %45, %cst_29 {dimension_numbers = #tpu.dot_dimension_numbers<[1], [0], [0], [1], [0, 0, 1, 1], [], []>} : vector<8x4xf32>, vector<4x384xf32>, vector<8x384xf32> -> vector<8x384xf32>
    %47 = arith.addf %42, %46 : vector<8x384xf32>
    %c8 = arith.constant 8 : index
    %c0_30 = arith.constant 0 : index
    %c0_31 = arith.constant 0 : index
    %48 = vector.load %arg4[%c8, %c0_30, %c0_31] : memref<9x8x4xf32, #tpu.memory_space<vmem>>, vector<1x8x4xf32>
    %49 = vector.shape_cast %48 : vector<1x8x4xf32> to vector<8x4xf32>
    %50 = vector.extract_strided_slice %6 {offsets = [0, 38], sizes = [4, 384], strides = [1, 1]} : vector<4x512xf32> to vector<4x384xf32>
    %cst_32 = arith.constant dense<0.000000e+00> : vector<8x384xf32>
    %51 = tpu.matmul %49, %50, %cst_32 {dimension_numbers = #tpu.dot_dimension_numbers<[1], [0], [0], [1], [0, 0, 1, 1], [], []>} : vector<8x4xf32>, vector<4x384xf32>, vector<8x384xf32> -> vector<8x384xf32>
    %52 = arith.addf %47, %51 : vector<8x384xf32>
    %c0_33 = arith.constant 0 : index
    %c0_34 = arith.constant 0 : index
    %53 = vector.load %arg5[%c0_33, %c0_34] : memref<8x1xf32, #tpu.memory_space<vmem>>, vector<8x1xf32>
    %54 = vector.broadcast %53 : vector<8x1xf32> to vector<8x384xf32>
    %55 = arith.addf %52, %54 : vector<8x384xf32>
    %cst_35 = arith.constant 0.000000e+00 : f32
    %56 = vector.broadcast %cst_35 : f32 to vector<8x384xf32>
    %57 = arith.maximumf %55, %56 : vector<8x384xf32>
    %58 = arith.truncf %57 : vector<8x384xf32> to vector<8x384xbf16>
    %c0_36 = arith.constant 0 : index
    %c0_37 = arith.constant 0 : index
    %c0_38 = arith.constant 0 : index
    %59 = vector.load %arg6[%c0_36, %c0_37, %c0_38] : memref<1x8x384xbf16, #tpu.memory_space<vmem>>, vector<1x8x384xbf16>
    %60 = vector.shape_cast %59 : vector<1x8x384xbf16> to vector<8x384xbf16>
    %61 = vector.shape_cast %58 : vector<8x384xbf16> to vector<1x8x384xbf16>
    tpu.vector_store %arg6[%c0_36, %c0_37, %c0_38], %61 {strides = array<i32>} : memref<1x8x384xbf16, #tpu.memory_space<vmem>>, vector<1x8x384xbf16>,
    return
  }
  func.func @transform_0(%arg0: i32, %arg1: i32) -> (i32, i32, i32) {
    %c0_i32 = arith.constant 0 : i32
    %c0_i32_0 = arith.constant 0 : i32
    return %arg0, %c0_i32, %arg1 : i32, i32, i32
  }
  func.func @transform_1(%arg0: i32, %arg1: i32) -> (i32, i32, i32) {
    %c1_i32 = arith.constant 1 : i32
    %0 = arith.addi %arg1, %c1_i32 : i32
    %c3_i32 = arith.constant 3 : i32
    %1 = arith.muli %0, %c3_i32 : i32
    %c0_i32 = arith.constant 0 : i32
    %c0_i32_0 = arith.constant 0 : i32
    return %arg0, %c0_i32, %1 : i32, i32, i32
  }
  func.func @transform_2(%arg0: i32, %arg1: i32) -> (i32, i32, i32) {
    %c0_i32 = arith.constant 0 : i32
    %c0_i32_0 = arith.constant 0 : i32
    %c0_i32_1 = arith.constant 0 : i32
    %c0_i32_2 = arith.constant 0 : i32
    return %c0_i32, %c0_i32_0, %c0_i32_1 : i32, i32, i32
  }
  func.func @transform_3(%arg0: i32, %arg1: i32) -> (i32, i32) {
    %c0_i32 = arith.constant 0 : i32
    %c0_i32_0 = arith.constant 0 : i32
    %c0_i32_1 = arith.constant 0 : i32
    return %c0_i32, %c0_i32_0 : i32, i32
  }
  func.func @transform_4(%arg0: i32, %arg1: i32) -> (i32, i32, i32) {
    %c0_i32 = arith.constant 0 : i32
    %c0_i32_0 = arith.constant 0 : i32
    return %arg0, %c0_i32, %arg1 : i32, i32, i32
  }
}

</mosaic_0001>

<llo_original>
// kernel: tpu_custom_call.1
$region0: #{tpu_custom_call.1}
  #allocation0 [shape = 'u32[]', space=smem, size = 0x4, offset = 0x4, fixed_abs, tag = 'smem constant byte address 0x4 - core index']
  #allocation1 [shape = 'u32[144,128]{1,0:T(1,128)}', space=vmem, size = 0x12000, scoped, tag = 'internal scratch']
  %s0 = inlined_call_operand.vmem [shape: bf16[2,4,768], index: 0, kind: input, shape index: {}]
  %s1 = inlined_call_operand.vmem [shape: bf16[2,4,768], index: 1, kind: input, shape index: {}]
  %s2 = inlined_call_operand.vmem [shape: f32[9,8,4], index: 2, kind: input, shape index: {}]
  %s3 = inlined_call_operand.vmem [shape: f32[8,1], index: 3, kind: input, shape index: {}]
  %s4 = inlined_call_operand.hbm [shape: bf16[2,8,384], index: 4, kind: output, shape index: {}]
  %s5 = sld [smem:[#allocation0]]
  $region49: #{tpu_custom_call.1} parent=0
    _
  %s7 = ssub.s32 1, %s5
  %s8 = scalar_select 0, %s7, %s5
  $region1: #{tpu_custom_call.1} parent=0
    #allocation2 [shape = 'u8[12288]{0}', space=vmem, size = 0x3000, scoped, tag = 'output window, operand 0']
    #allocation3 [shape = 's32[2]{0}', space=sflag, size = 0x8, scoped, tag = 'scoped memory for tpu_custom_call.1']
    %9 = vsyncpa [#allocation3], 0
    %s10 = scalar_lea.sflag [#allocation3], 1
    %11 = vsyncpa %s10, 0
    loop: start=0, step=1, limit=4
    $region2: #{tpu_custom_call.1} parent=1 // loop_pre_header
      _
    $region3: #{tpu_custom_call.1} parent=1 // loop_header
      %s13 = sphi 0, %s17
      %p14 = scmp.ge.s32.totalorder %s13, 4
      %s20 = sphi 0, %s32
      %s21 = sphi 0, %s28
      %s22 = sphi 0, %s20
      %s23 = sphi 0, %s21
      %s24 = sphi 0, %s22
      %s25 = sphi 0, %s23
      %s37 = sphi 0, %s39
      %s40 = sphi 0, %s37
      %s41 = sphi 0, %s40
      %s57 = sphi 0, %s41
      %s69 = sphi 0, %s71
      %s72 = sphi 0, %s69
      %s73 = sphi 0, %s72
      %s89 = sphi 0, %s73
      %s93 = sphi 0, %s93
      %s95 = sphi 0, %s93
      %s96 = sphi 0, %s95
      %s110 = sphi 0, %s96
      %s114 = sphi 0, %s114
      %s116 = sphi 0, %s114
      %s117 = sphi 0, %s116
      %s131 = sphi 0, %s117
      %s139 = sphi 0, %s141
      %s142 = sphi 0, %s139
      %s143 = sphi 0, %s142
      %s159 = sphi 0, %s143
    $region4: #{tpu_custom_call.1} parent=1 // loop_header_branch
      %16 = sbr.rel (%p14) target = $region8
    $region5: #{tpu_custom_call.1} parent=1 // loop_body
      %s18 = ssub.s32 %s13, 1
      %s19 = ssub.s32 %s13, 2
      %s26 = sadd.s32 1, %s21
      %p27 = scmp.ge.s32.totalorder %s26, 1
      %s28 = scalar_select %p27, 0, %s26
      %s29 = sadd.s32 1, %s20
      %s30 = scalar_select %p27, %s29, %s20
      %p31 = scmp.ge.s32.totalorder %s30, 2
      %s32 = scalar_select %p31, 0, %s30
      %s33 = ssub.s32 %s20, %s32
      %s34 = ssub.s32 %s21, %s28
      %s35 = sor.u32 %s33, %s34
      %p36 = scmp.eq.s32.totalorder %s35, 0
      %s38 = sadd.s32 %s37, 1
      %s39 = scalar_select %p36, %s37, %s38
      %p42 = pneg %p36
      %p43 = scmp.eq.s32.totalorder %s13, 1
      %p44 = por %p42, %p43
      %p45 = scmp.ne.s32.totalorder %s37, %s40
      %p46 = scmp.eq.s32.totalorder %s13, 0
      %p47 = por %p45, %p46
      %p48 = scmp.ne.s32.totalorder %s37, %s40
      %p49 = scmp.eq.s32.totalorder %s18, 1
      %p50 = por %p48, %p49
      %p51 = scmp.ne.s32.totalorder %s40, %s41
      %p52 = scmp.eq.s32.totalorder %s18, 0
      %p53 = por %p51, %p52
      %p54 = scmp.ne.s32.totalorder %s40, %s41
      %p55 = scmp.eq.s32.totalorder %s19, 1
      %p56 = por %p54, %p55
      %p58 = scmp.ne.s32.totalorder %s41, %s57
      %p59 = scmp.eq.s32.totalorder %s19, 0
      %p60 = por %p58, %p59
      %s61 = sadd.s32 %s21, 1
      %s62 = smul.u32 %s61, 3
      %s63 = sadd.s32 %s28, 1
      %s64 = smul.u32 %s63, 3
      %s65 = ssub.s32 %s20, %s32
      %s66 = ssub.s32 %s62, %s64
      %s67 = sor.u32 %s65, %s66
      %p68 = scmp.eq.s32.totalorder %s67, 0
      %s70 = sadd.s32 %s69, 1
      %s71 = scalar_select %p68, %s69, %s70
      %p74 = pneg %p68
      %p75 = scmp.eq.s32.totalorder %s13, 1
      %p76 = por %p74, %p75
      %p77 = scmp.ne.s32.totalorder %s69, %s72
      %p78 = scmp.eq.s32.totalorder %s13, 0
      %p79 = por %p77, %p78
      %p80 = scmp.ne.s32.totalorder %s69, %s72
      %p81 = scmp.eq.s32.totalorder %s18, 1
      %p82 = por %p80, %p81
      %p83 = scmp.ne.s32.totalorder %s72, %s73
      %p84 = scmp.eq.s32.totalorder %s18, 0
      %p85 = por %p83, %p84
      %p86 = scmp.ne.s32.totalorder %s72, %s73
      %p87 = scmp.eq.s32.totalorder %s19, 1
      %p88 = por %p86, %p87
      %p90 = scmp.ne.s32.totalorder %s73, %s89
      %p91 = scmp.eq.s32.totalorder %s19, 0
      %p92 = por %p90, %p91
      %s94 = sadd.s32 %s93, 1
      %p97 = scmp.eq.s32.totalorder %s13, 1
      %p98 = scmp.ne.s32.totalorder %s93, %s95
      %p99 = scmp.eq.s32.totalorder %s13, 0
      %p100 = por %p98, %p99
      %p101 = scmp.ne.s32.totalorder %s93, %s95
      %p102 = scmp.eq.s32.totalorder %s18, 1
      %p103 = por %p101, %p102
      %p104 = scmp.ne.s32.totalorder %s95, %s96
      %p105 = scmp.eq.s32.totalorder %s18, 0
      %p106 = por %p104, %p105
      %p107 = scmp.ne.s32.totalorder %s95, %s96
      %p108 = scmp.eq.s32.totalorder %s19, 1
      %p109 = por %p107, %p108
      %p111 = scmp.ne.s32.totalorder %s96, %s110
      %p112 = scmp.eq.s32.totalorder %s19, 0
      %p113 = por %p111, %p112
      %s115 = sadd.s32 %s114, 1
      %p118 = scmp.eq.s32.totalorder %s13, 1
      %p119 = scmp.ne.s32.totalorder %s114, %s116
      %p120 = scmp.eq.s32.totalorder %s13, 0
      %p121 = por %p119, %p120
      %p122 = scmp.ne.s32.totalorder %s114, %s116
      %p123 = scmp.eq.s32.totalorder %s18, 1
      %p124 = por %p122, %p123
      %p125 = scmp.ne.s32.totalorder %s116, %s117
      %p126 = scmp.eq.s32.totalorder %s18, 0
      %p127 = por %p125, %p126
      %p128 = scmp.ne.s32.totalorder %s116, %s117
      %p129 = scmp.eq.s32.totalorder %s19, 1
      %p130 = por %p128, %p129
      %p132 = scmp.ne.s32.totalorder %s117, %s131
      %p133 = scmp.eq.s32.totalorder %s19, 0
      %p134 = por %p132, %p133
      %s135 = ssub.s32 %s20, %s32
      %s136 = ssub.s32 %s21, %s28
      %s137 = sor.u32 %s135, %s136
      %p138 = scmp.eq.s32.totalorder %s137, 0
      %s140 = sadd.s32 %s139, 1
      %s141 = scalar_select %p138, %s139, %s140
      %p144 = pneg %p138
      %p145 = scmp.eq.s32.totalorder %s13, 1
      %p146 = por %p144, %p145
      %p147 = scmp.ne.s32.totalorder %s139, %s142
      %p148 = scmp.eq.s32.totalorder %s13, 0
      %p149 = por %p147, %p148
      %p150 = scmp.ne.s32.totalorder %s139, %s142
      %p151 = scmp.eq.s32.totalorder %s18, 1
      %p152 = por %p150, %p151
      %p153 = scmp.ne.s32.totalorder %s142, %s143
      %p154 = scmp.eq.s32.totalorder %s18, 0
      %p155 = por %p153, %p154
      %p156 = scmp.ne.s32.totalorder %s142, %s143
      %p157 = scmp.eq.s32.totalorder %s19, 1
      %p158 = por %p156, %p157
      %p160 = scmp.ne.s32.totalorder %s143, %s159
      %p161 = scmp.eq.s32.totalorder %s19, 0
      %p162 = por %p160, %p161
      %p163 = scmp.le.s32.totalorder 1, %s13
      %p164 = scmp.lt.s32.totalorder %s13, 3
      %p165 = pnand %p163, %p164
      %p166 = pneg %p165
      // Predicated region
      $region9: #{tpu_custom_call.1} parent=5 // pred_check
        _
      $region10: #{tpu_custom_call.1} parent=5 // pred_check_branch
        %168 = sbr.rel (%p165) target = $region12
      $region11: #{tpu_custom_call.1} parent=5 // pred_region
        %s169 = ssub.s32 %s13, 1
        // Predicated region
        $region13: #{tpu_custom_call.1} parent=11 // pred_check
          %p170 = pneg %p106
        $region14: #{tpu_custom_call.1} parent=11 // pred_check_branch
          %172 = sbr.rel (%p170) target = $region16
        $region15: #{tpu_custom_call.1} parent=11 // pred_region
          _
        $region16: #{tpu_custom_call.1} parent=11 // pred_fallthru
          _
        // Predicated region
        $region17: #{tpu_custom_call.1} parent=11 // pred_check
          %p173 = pneg %p127
        $region18: #{tpu_custom_call.1} parent=11 // pred_check_branch
          %175 = sbr.rel (%p173) target = $region20
        $region19: #{tpu_custom_call.1} parent=11 // pred_region
          _
        $region20: #{tpu_custom_call.1} parent=11 // pred_fallthru
          _
      $region12: #{tpu_custom_call.1} parent=5 // pred_fallthru
        _
      %p176 = scmp.lt.s32.totalorder %s13, 2
      // Predicated region
      $region21: #{tpu_custom_call.1} parent=5 // pred_check
        %p177 = pneg %p176
      $region22: #{tpu_custom_call.1} parent=5 // pred_check_branch
        %179 = sbr.rel (%p177) target = $region24
      $region23: #{tpu_custom_call.1} parent=5 // pred_region
        // Predicated region
        $region25: #{tpu_custom_call.1} parent=23 // pred_check
          %p180 = pneg %p47
        $region26: #{tpu_custom_call.1} parent=23 // pred_check_branch
          %182 = sbr.rel (%p180) target = $region28
        $region27: #{tpu_custom_call.1} parent=23 // pred_region
          %s183 = smul.u32 3, %s21
          %p184 = scmp.lt.s32.totalorder %s20, 1
          %s185 = scalar_select %p184, %s20, 1
          %p186 = scmp.lt.s32.totalorder %s183, 5
          %s187 = scalar_select %p186, %s183, 5
          %s188 = smul.addr %s185, 6
          %s189 = sadd.s32 %s187, %s188
          %s190 = smul.addr %s189, 2
          %s191 = scalar_lea.vmem %s0, %s190
          %s192 = smul.u32 3, %s21
        $region28: #{tpu_custom_call.1} parent=23 // pred_fallthru
          _
        // Predicated region
        $region29: #{tpu_custom_call.1} parent=23 // pred_check
          %p193 = pneg %p79
        $region30: #{tpu_custom_call.1} parent=23 // pred_check_branch
          %195 = sbr.rel (%p193) target = $region32
        $region31: #{tpu_custom_call.1} parent=23 // pred_region
          %s196 = sadd.s32 %s21, 1
          %s197 = smul.u32 %s196, 3
          %p198 = scmp.lt.s32.totalorder %s20, 1
          %s199 = scalar_select %p198, %s20, 1
          %p200 = scmp.lt.s32.totalorder %s197, 5
          %s201 = scalar_select %p200, %s197, 5
          %s202 = smul.addr %s199, 6
          %s203 = sadd.s32 %s201, %s202
          %s204 = smul.addr %s203, 2
          %s205 = scalar_lea.vmem %s1, %s204
          %s206 = sadd.s32 %s21, 1
          %s207 = smul.u32 %s206, 3
        $region32: #{tpu_custom_call.1} parent=23 // pred_fallthru
          _
      $region24: #{tpu_custom_call.1} parent=5 // pred_fallthru
        _
      %p208 = scmp.le.s32.totalorder 1, %s13
      %p209 = scmp.lt.s32.totalorder %s13, 3
      %p210 = pnand %p208, %p209
      %p211 = pneg %p210
      // Predicated region
      $region33: #{tpu_custom_call.1} parent=5 // pred_check
        _
      $region34: #{tpu_custom_call.1} parent=5 // pred_check_branch
        %213 = sbr.rel (%p210) target = $region36
      $region35: #{tpu_custom_call.1} parent=5 // pred_region
        %s214 = ssub.s32 %s13, 1
        %s215 = smul.u32 3, %s23
        %p216 = scmp.lt.s32.totalorder %s22, 1
        %s217 = scalar_select %p216, %s22, 1
        %p218 = scmp.lt.s32.totalorder %s215, 5
        %s219 = scalar_select %p218, %s215, 5
        %s220 = smul.addr %s217, 6
        %s221 = sadd.s32 %s219, %s220
        %s222 = smul.addr %s221, 2
        %s223 = scalar_lea.vmem %s0, %s222
        %p224 = pneg %p53
        %p225 = pneg %p50
        %s226 = sadd.s32 %s23, 1
        %s227 = smul.u32 %s226, 3
        %p228 = scmp.lt.s32.totalorder %s22, 1
        %s229 = scalar_select %p228, %s22, 1
        %p230 = scmp.lt.s32.totalorder %s227, 5
        %s231 = scalar_select %p230, %s227, 5
        %s232 = smul.addr %s229, 6
        %s233 = sadd.s32 %s231, %s232
        %s234 = smul.addr %s233, 2
        %s235 = scalar_lea.vmem %s1, %s234
        %p236 = pneg %p85
        %p237 = pneg %p82
        %p238 = pneg %p106
        %p239 = pneg %p103
        %p240 = pneg %p127
        %p241 = pneg %p124
        %p242 = pneg %p155
        %p243 = pneg %p152
        %s244 = sand.u32 %s142, 1
        %s245 = scalar_lea.sflag [#allocation3], %s244
        %s246 = sand.u32 %s142, 1
        %s247 = smul.addr %s246, 12
        %s248 = scalar_lea.vmem [#allocation2], %s247
        %s249 = smul.u32 3, %s23
        %p250 = scmp.lt.s32.totalorder %s22, 1
        %s251 = scalar_select %p250, %s22, 1
        %p252 = scmp.lt.s32.totalorder %s249, 5
        %s253 = scalar_select %p252, %s249, 5
        %s254 = smul.addr %s251, 6
        %s255 = sadd.s32 %s253, %s254
        %s256 = smul.addr %s255, 2
        %s257 = scalar_lea.vmem %s0, %s256
        %s258 = smul.u32 3, %s23
        %s259 = sadd.s32 %s23, 1
        %s260 = smul.u32 %s259, 3
        %p261 = scmp.lt.s32.totalorder %s22, 1
        %s262 = scalar_select %p261, %s22, 1
        %p263 = scmp.lt.s32.totalorder %s260, 5
        %s264 = scalar_select %p263, %s260, 5
        %s265 = smul.addr %s262, 6
        %s266 = sadd.s32 %s264, %s265
        %s267 = smul.addr %s266, 2
        %s268 = scalar_lea.vmem %s1, %s267
        %s269 = sadd.s32 %s23, 1
        %s270 = smul.u32 %s269, 3
        %s271 = smul.u32 3, %s23
        %v272 = vld [vmem:[%s257] sm:$0x3f]
        %v273 = vunpack.c.l.bf16 %v272
        %v274 = vunpack.c.h.bf16 %v272
        %v275 = vld [vmem:[%s268] sm:$0x3]
        %v276 = vunpack.c.l.bf16 %v275
        %v279 = vcombine.high %v273, %v273
        %v280 = vld [vmem:[%s2] sm:$0xff]
        %s281 = scalar_lea.vmem %s2, 8
        %v282 = vld [vmem:[%s281] sm:$0xff]
        %284 = vrot.lane.b32.xlu0 %v273, 127
        %v285 = vpop.permute.xlu0 %284
        %286 = vrot.lane.b32.xlu0 %v279, 127
        %v287 = vpop.permute.xlu0 %286
        %288 = vrot.lane.b32.xlu0 %v274, 127
        %v289 = vpop.permute.xlu0 %288
        %290 = vrot.lane.b32.xlu0 %v276, 127
        %v291 = vpop.permute.xlu0 %290
        %vm292 = vcmask 1039360
        %v293 = vsel %vm292, %v285, %v287
        %v294 = vsel %vm292, %v287, %v289
        %v295 = vsel %vm292, %v289, %v291
        %vm296 = vcmask 31744
        %v298 = vsel %vm296, %v282, 0
        %vm300 = vcmask 1043456
        %v301 = vsel %vm300, %v293, 0
        %v303 = vsel %vm300, %v294, 0
        %v305 = vsel %vm300, %v295, 0
        %307 = vmatprep.subr.mxu0 %v303
        %308 = vmatpush1.msra.mxu0 %v301
        %309 = vmatprep.subr.mxu0 0.0
        %310 = vmatpush1.msra.mxu0 0.0
        %311 = vmatprep.subr.mxu0 0.0
        %312 = vmatpush1.msra.mxu0 0.0
        %313 = vmatprep.subr.mxu0 0.0
        %314 = vmatpush1.msra.mxu0 0.0
        %315 = vmatprep.subr.mxu0 0.0
        %316 = vmatpush1.msra.mxu0 0.0
        %317 = vmatprep.subr.mxu0 0.0
        %318 = vmatpush1.msra.mxu0 0.0
        %319 = vmatprep.subr.mxu0 0.0
        %320 = vmatpush1.msra.mxu0 0.0
        %321 = vmatprep.subr.mxu0 0.0
        %322 = vmatpush1.msra.mxu0 0.0
        %323 = vmatprep.subr.mxu0 0.0
        %324 = vmatpush1.msra.mxu0 0.0
        %325 = vmatprep.subr.mxu0 0.0
        %326 = vmatpush1.msra.mxu0 0.0
        %327 = vmatprep.subr.mxu0 0.0
        %328 = vmatpush1.msra.mxu0 0.0
        %329 = vmatprep.subr.mxu0 0.0
        %330 = vmatpush1.msra.mxu0 0.0
        %331 = vmatprep.subr.mxu0 0.0
        %332 = vmatpush1.msra.mxu0 0.0
        %333 = vmatprep.subr.mxu0 0.0
        %334 = vmatpush1.msra.mxu0 0.0
        %335 = vmatprep.subr.mxu0 0.0
        %336 = vmatpush1.msra.mxu0 0.0
        %337 = vmatprep.subr.mxu0 0.0
        %338 = vmatpush1.msra.mxu0 0.0
        %339 = vmatprep.subr.mxu0 0.0
        %340 = vmatpush1.msra.mxu0 0.0
        %341 = vmatprep.subr.mxu0 0.0
        %342 = vmatpush1.msra.mxu0 0.0
        %343 = vmatprep.subr.mxu0 0.0
        %344 = vmatpush1.msra.mxu0 0.0
        %345 = vmatprep.subr.mxu0 0.0
        %346 = vmatpush1.msra.mxu0 0.0
        %347 = vmatprep.subr.mxu0 0.0
        %348 = vmatpush1.msra.mxu0 0.0
        %349 = vmatprep.subr.mxu0 0.0
        %350 = vmatpush1.msra.mxu0 0.0
        %351 = vmatprep.subr.mxu0 0.0
        %352 = vmatpush1.msra.mxu0 0.0
        %353 = vmatprep.subr.mxu0 0.0
        %354 = vmatpush1.msra.mxu0 0.0
        %355 = vmatprep.subr.mxu0 0.0
        %356 = vmatpush1.msra.mxu0 0.0
        %357 = vmatprep.subr.mxu0 0.0
        %358 = vmatpush1.msra.mxu0 0.0
        %359 = vmatprep.subr.mxu0 0.0
        %360 = vmatpush1.msra.mxu0 0.0
        %361 = vmatprep.subr.mxu0 0.0
        %362 = vmatpush1.msra.mxu0 0.0
        %363 = vmatprep.subr.mxu0 0.0
        %364 = vmatpush1.msra.mxu0 0.0
        %365 = vmatprep.subr.mxu0 0.0
        %366 = vmatpush1.msra.mxu0 0.0
        %367 = vmatprep.subr.mxu0 0.0
        %368 = vmatpush1.msra.mxu0 0.0
        %369 = vmatprep.subr.mxu0 0.0
        %370 = vmatpush1.msra.mxu0 0.0
        %371 = vmatprep.mubr.f32.mxu0 0.0
        %372 = vmatmul.mubr.f32.gmra.mrb[0].mxu0 %v298
        %v373 = vpop.f32.mrb[0].mxu0
        %v374 = vadd.f32 0.0, %v373
        %v375 = vpop.f32.mrb[0].mxu0
        %v376 = vadd.f32 0.0, %v375
        %377 = vdwg.mxu0
        %378 = vmatprep.subr.mxu0 0.0
        %379 = vmatpush1.msra.mxu0 %v305
        %380 = vmatprep.subr.mxu0 0.0
        %381 = vmatpush1.msra.mxu0 0.0
        %382 = vmatprep.subr.mxu0 0.0
        %383 = vmatpush1.msra.mxu0 0.0
        %384 = vmatprep.subr.mxu0 0.0
        %385 = vmatpush1.msra.mxu0 0.0
        %386 = vmatprep.subr.mxu0 0.0
        %387 = vmatpush1.msra.mxu0 0.0
        %388 = vmatprep.subr.mxu0 0.0
        %389 = vmatpush1.msra.mxu0 0.0
        %390 = vmatprep.subr.mxu0 0.0
        %391 = vmatpush1.msra.mxu0 0.0
        %392 = vmatprep.subr.mxu0 0.0
        %393 = vmatpush1.msra.mxu0 0.0
        %394 = vmatprep.subr.mxu0 0.0
        %395 = vmatpush1.msra.mxu0 0.0
        %396 = vmatprep.subr.mxu0 0.0
        %397 = vmatpush1.msra.mxu0 0.0
        %398 = vmatprep.subr.mxu0 0.0
        %399 = vmatpush1.msra.mxu0 0.0
        %400 = vmatprep.subr.mxu0 0.0
        %401 = vmatpush1.msra.mxu0 0.0
        %402 = vmatprep.subr.mxu0 0.0
        %403 = vmatpush1.msra.mxu0 0.0
        %404 = vmatprep.subr.mxu0 0.0
        %405 = vmatpush1.msra.mxu0 0.0
        %406 = vmatprep.subr.mxu0 0.0
        %407 = vmatpush1.msra.mxu0 0.0
        %408 = vmatprep.subr.mxu0 0.0
        %409 = vmatpush1.msra.mxu0 0.0
        %410 = vmatprep.subr.mxu0 0.0
        %411 = vmatpush1.msra.mxu0 0.0
        %412 = vmatprep.subr.mxu0 0.0
        %413 = vmatpush1.msra.mxu0 0.0
        %414 = vmatprep.subr.mxu0 0.0
        %415 = vmatpush1.msra.mxu0 0.0
        %416 = vmatprep.subr.mxu0 0.0
        %417 = vmatpush1.msra.mxu0 0.0
        %418 = vmatprep.subr.mxu0 0.0
        %419 = vmatpush1.msra.mxu0 0.0
        %420 = vmatprep.subr.mxu0 0.0
        %421 = vmatpush1.msra.mxu0 0.0
        %422 = vmatprep.subr.mxu0 0.0
        %423 = vmatpush1.msra.mxu0 0.0
        %424 = vmatprep.subr.mxu0 0.0
        %425 = vmatpush1.msra.mxu0 0.0
        %426 = vmatprep.subr.mxu0 0.0
        %427 = vmatpush1.msra.mxu0 0.0
        %428 = vmatprep.subr.mxu0 0.0
        %429 = vmatpush1.msra.mxu0 0.0
        %430 = vmatprep.subr.mxu0 0.0
        %431 = vmatpush1.msra.mxu0 0.0
        %432 = vmatprep.subr.mxu0 0.0
        %433 = vmatpush1.msra.mxu0 0.0
        %434 = vmatprep.subr.mxu0 0.0
        %435 = vmatpush1.msra.mxu0 0.0
        %436 = vmatprep.subr.mxu0 0.0
        %437 = vmatpush1.msra.mxu0 0.0
        %438 = vmatprep.subr.mxu0 0.0
        %439 = vmatpush1.msra.mxu0 0.0
        %440 = vmatprep.subr.mxu0 0.0
        %441 = vmatpush1.msra.mxu0 0.0
        %442 = vmatprep.mubr.f32.mxu0 0.0
        %443 = vmatmul.mubr.f32.gmra.mrb[0].mxu0 %v298
        %v444 = vpop.f32.mrb[0].mxu0
        %v445 = vadd.f32 0.0, %v444
        %v446 = vpop.f32.mrb[0].mxu0
        %447 = vdwg.mxu0
        %v449 = vsel %vm296, %v280, 0
        %v451 = vsel %vm300, %v273, 0
        %v453 = vsel %vm300, %v279, 0
        %v455 = vsel %vm300, %v274, 0
        %457 = vmatprep.subr.mxu0 %v453
        %458 = vmatpush1.msra.mxu0 %v451
        %459 = vmatprep.subr.mxu0 0.0
        %460 = vmatpush1.msra.mxu0 0.0
        %461 = vmatprep.subr.mxu0 0.0
        %462 = vmatpush1.msra.mxu0 0.0
        %463 = vmatprep.subr.mxu0 0.0
        %464 = vmatpush1.msra.mxu0 0.0
        %465 = vmatprep.subr.mxu0 0.0
        %466 = vmatpush1.msra.mxu0 0.0
        %467 = vmatprep.subr.mxu0 0.0
        %468 = vmatpush1.msra.mxu0 0.0
        %469 = vmatprep.subr.mxu0 0.0
        %470 = vmatpush1.msra.mxu0 0.0
        %471 = vmatprep.subr.mxu0 0.0
        %472 = vmatpush1.msra.mxu0 0.0
        %473 = vmatprep.subr.mxu0 0.0
        %474 = vmatpush1.msra.mxu0 0.0
        %475 = vmatprep.subr.mxu0 0.0
        %476 = vmatpush1.msra.mxu0 0.0
        %477 = vmatprep.subr.mxu0 0.0
        %478 = vmatpush1.msra.mxu0 0.0
        %479 = vmatprep.subr.mxu0 0.0
        %480 = vmatpush1.msra.mxu0 0.0
        %481 = vmatprep.subr.mxu0 0.0
        %482 = vmatpush1.msra.mxu0 0.0
        %483 = vmatprep.subr.mxu0 0.0
        %484 = vmatpush1.msra.mxu0 0.0
        %485 = vmatprep.subr.mxu0 0.0
        %486 = vmatpush1.msra.mxu0 0.0
        %487 = vmatprep.subr.mxu0 0.0
        %488 = vmatpush1.msra.mxu0 0.0
        %489 = vmatprep.subr.mxu0 0.0
        %490 = vmatpush1.msra.mxu0 0.0
        %491 = vmatprep.subr.mxu0 0.0
        %492 = vmatpush1.msra.mxu0 0.0
        %493 = vmatprep.subr.mxu0 0.0
        %494 = vmatpush1.msra.mxu0 0.0
        %495 = vmatprep.subr.mxu0 0.0
        %496 = vmatpush1.msra.mxu0 0.0
        %497 = vmatprep.subr.mxu0 0.0
        %498 = vmatpush1.msra.mxu0 0.0
        %499 = vmatprep.subr.mxu0 0.0
        %500 = vmatpush1.msra.mxu0 0.0
        %501 = vmatprep.subr.mxu0 0.0
        %502 = vmatpush1.msra.mxu0 0.0
        %503 = vmatprep.subr.mxu0 0.0
        %504 = vmatpush1.msra.mxu0 0.0
        %505 = vmatprep.subr.mxu0 0.0
        %506 = vmatpush1.msra.mxu0 0.0
        %507 = vmatprep.subr.mxu0 0.0
        %508 = vmatpush1.msra.mxu0 0.0
        %509 = vmatprep.subr.mxu0 0.0
        %510 = vmatpush1.msra.mxu0 0.0
        %511 = vmatprep.subr.mxu0 0.0
        %512 = vmatpush1.msra.mxu0 0.0
        %513 = vmatprep.subr.mxu0 0.0
        %514 = vmatpush1.msra.mxu0 0.0
        %515 = vmatprep.subr.mxu0 0.0
        %516 = vmatpush1.msra.mxu0 0.0
        %517 = vmatprep.subr.mxu0 0.0
        %518 = vmatpush1.msra.mxu0 0.0
        %519 = vmatprep.subr.mxu0 0.0
        %520 = vmatpush1.msra.mxu0 0.0
        %521 = vmatprep.mubr.f32.mxu0 0.0
        %522 = vmatmul.mubr.f32.gmra.mrb[0].mxu0 %v449
        %v523 = vpop.f32.mrb[0].mxu0
        %v524 = vadd.f32 %v374, %v523
        %v525 = vpop.f32.mrb[0].mxu0
        %v526 = vadd.f32 %v376, %v525
        %527 = vdwg.mxu0
        %528 = vmatprep.subr.mxu0 0.0
        %529 = vmatpush1.msra.mxu0 %v455
        %530 = vmatprep.subr.mxu0 0.0
        %531 = vmatpush1.msra.mxu0 0.0
        %532 = vmatprep.subr.mxu0 0.0
        %533 = vmatpush1.msra.mxu0 0.0
        %534 = vmatprep.subr.mxu0 0.0
        %535 = vmatpush1.msra.mxu0 0.0
        %536 = vmatprep.subr.mxu0 0.0
        %537 = vmatpush1.msra.mxu0 0.0
        %538 = vmatprep.subr.mxu0 0.0
        %539 = vmatpush1.msra.mxu0 0.0
        %540 = vmatprep.subr.mxu0 0.0
        %541 = vmatpush1.msra.mxu0 0.0
        %542 = vmatprep.subr.mxu0 0.0
        %543 = vmatpush1.msra.mxu0 0.0
        %544 = vmatprep.subr.mxu0 0.0
        %545 = vmatpush1.msra.mxu0 0.0
        %546 = vmatprep.subr.mxu0 0.0
        %547 = vmatpush1.msra.mxu0 0.0
        %548 = vmatprep.subr.mxu0 0.0
        %549 = vmatpush1.msra.mxu0 0.0
        %550 = vmatprep.subr.mxu0 0.0
        %551 = vmatpush1.msra.mxu0 0.0
        %552 = vmatprep.subr.mxu0 0.0
        %553 = vmatpush1.msra.mxu0 0.0
        %554 = vmatprep.subr.mxu0 0.0
        %555 = vmatpush1.msra.mxu0 0.0
        %556 = vmatprep.subr.mxu0 0.0
        %557 = vmatpush1.msra.mxu0 0.0
        %558 = vmatprep.subr.mxu0 0.0
        %559 = vmatpush1.msra.mxu0 0.0
        %560 = vmatprep.subr.mxu0 0.0
        %561 = vmatpush1.msra.mxu0 0.0
        %562 = vmatprep.subr.mxu0 0.0
        %563 = vmatpush1.msra.mxu0 0.0
        %564 = vmatprep.subr.mxu0 0.0
        %565 = vmatpush1.msra.mxu0 0.0
        %566 = vmatprep.subr.mxu0 0.0
        %567 = vmatpush1.msra.mxu0 0.0
        %568 = vmatprep.subr.mxu0 0.0
        %569 = vmatpush1.msra.mxu0 0.0
        %570 = vmatprep.subr.mxu0 0.0
        %571 = vmatpush1.msra.mxu0 0.0
        %572 = vmatprep.subr.mxu0 0.0
        %573 = vmatpush1.msra.mxu0 0.0
        %574 = vmatprep.subr.mxu0 0.0
        %575 = vmatpush1.msra.mxu0 0.0
        %576 = vmatprep.subr.mxu0 0.0
        %577 = vmatpush1.msra.mxu0 0.0
        %578 = vmatprep.subr.mxu0 0.0
        %579 = vmatpush1.msra.mxu0 0.0
        %580 = vmatprep.subr.mxu0 0.0
        %581 = vmatpush1.msra.mxu0 0.0
        %582 = vmatprep.subr.mxu0 0.0
        %583 = vmatpush1.msra.mxu0 0.0
        %584 = vmatprep.subr.mxu0 0.0
        %585 = vmatpush1.msra.mxu0 0.0
        %586 = vmatprep.subr.mxu0 0.0
        %587 = vmatpush1.msra.mxu0 0.0
        %588 = vmatprep.subr.mxu0 0.0
        %589 = vmatpush1.msra.mxu0 0.0
        %590 = vmatprep.subr.mxu0 0.0
        %591 = vmatpush1.msra.mxu0 0.0
        %592 = vmatprep.mubr.f32.mxu0 0.0
        %593 = vmatmul.mubr.f32.gmra.mrb[0].mxu0 %v449
        %v594 = vpop.f32.mrb[0].mxu0
        %v595 = vadd.f32 %v445, %v594
        %v596 = vpop.f32.mrb[0].mxu0
        %597 = vdwg.mxu0
        %s598 = scalar_lea.vmem %s2, 16
        %v599 = vld [vmem:[%s598] sm:$0xff]
        %600 = vrot.lane.b32.xlu0 %v273, 126
        %v601 = vpop.permute.xlu0 %600
        %602 = vrot.lane.b32.xlu0 %v279, 126
        %v603 = vpop.permute.xlu0 %602
        %604 = vrot.lane.b32.xlu0 %v274, 126
        %v605 = vpop.permute.xlu0 %604
        %606 = vrot.lane.b32.xlu0 %v276, 126
        %v607 = vpop.permute.xlu0 %606
        %vm608 = vcmask 1031168
        %v609 = vsel %vm608, %v601, %v603
        %v610 = vsel %vm608, %v603, %v605
        %v611 = vsel %vm608, %v605, %v607
        %v613 = vsel %vm296, %v599, 0
        %v615 = vsel %vm300, %v609, 0
        %v617 = vsel %vm300, %v610, 0
        %v619 = vsel %vm300, %v611, 0
        %621 = vmatprep.subr.mxu0 %v617
        %622 = vmatpush1.msra.mxu0 %v615
        %623 = vmatprep.subr.mxu0 0.0
        %624 = vmatpush1.msra.mxu0 0.0
        %625 = vmatprep.subr.mxu0 0.0
        %626 = vmatpush1.msra.mxu0 0.0
        %627 = vmatprep.subr.mxu0 0.0
        %628 = vmatpush1.msra.mxu0 0.0
        %629 = vmatprep.subr.mxu0 0.0
        %630 = vmatpush1.msra.mxu0 0.0
        %631 = vmatprep.subr.mxu0 0.0
        %632 = vmatpush1.msra.mxu0 0.0
        %633 = vmatprep.subr.mxu0 0.0
        %634 = vmatpush1.msra.mxu0 0.0
        %635 = vmatprep.subr.mxu0 0.0
        %636 = vmatpush1.msra.mxu0 0.0
        %637 = vmatprep.subr.mxu0 0.0
        %638 = vmatpush1.msra.mxu0 0.0
        %639 = vmatprep.subr.mxu0 0.0
        %640 = vmatpush1.msra.mxu0 0.0
        %641 = vmatprep.subr.mxu0 0.0
        %642 = vmatpush1.msra.mxu0 0.0
        %643 = vmatprep.subr.mxu0 0.0
        %644 = vmatpush1.msra.mxu0 0.0
        %645 = vmatprep.subr.mxu0 0.0
        %646 = vmatpush1.msra.mxu0 0.0
        %647 = vmatprep.subr.mxu0 0.0
        %648 = vmatpush1.msra.mxu0 0.0
        %649 = vmatprep.subr.mxu0 0.0
        %650 = vmatpush1.msra.mxu0 0.0
        %651 = vmatprep.subr.mxu0 0.0
        %652 = vmatpush1.msra.mxu0 0.0
        %653 = vmatprep.subr.mxu0 0.0
        %654 = vmatpush1.msra.mxu0 0.0
        %655 = vmatprep.subr.mxu0 0.0
        %656 = vmatpush1.msra.mxu0 0.0
        %657 = vmatprep.subr.mxu0 0.0
        %658 = vmatpush1.msra.mxu0 0.0
        %659 = vmatprep.subr.mxu0 0.0
        %660 = vmatpush1.msra.mxu0 0.0
        %661 = vmatprep.subr.mxu0 0.0
        %662 = vmatpush1.msra.mxu0 0.0
        %663 = vmatprep.subr.mxu0 0.0
        %664 = vmatpush1.msra.mxu0 0.0
        %665 = vmatprep.subr.mxu0 0.0
        %666 = vmatpush1.msra.mxu0 0.0
        %667 = vmatprep.subr.mxu0 0.0
        %668 = vmatpush1.msra.mxu0 0.0
        %669 = vmatprep.subr.mxu0 0.0
        %670 = vmatpush1.msra.mxu0 0.0
        %671 = vmatprep.subr.mxu0 0.0
        %672 = vmatpush1.msra.mxu0 0.0
        %673 = vmatprep.subr.mxu0 0.0
        %674 = vmatpush1.msra.mxu0 0.0
        %675 = vmatprep.subr.mxu0 0.0
        %676 = vmatpush1.msra.mxu0 0.0
        %677 = vmatprep.subr.mxu0 0.0
        %678 = vmatpush1.msra.mxu0 0.0
        %679 = vmatprep.subr.mxu0 0.0
        %680 = vmatpush1.msra.mxu0 0.0
        %681 = vmatprep.subr.mxu0 0.0
        %682 = vmatpush1.msra.mxu0 0.0
        %683 = vmatprep.subr.mxu0 0.0
        %684 = vmatpush1.msra.mxu0 0.0
        %685 = vmatprep.mubr.f32.mxu0 0.0
        %686 = vmatmul.mubr.f32.gmra.mrb[0].mxu0 %v613
        %v687 = vpop.f32.mrb[0].mxu0
        %v688 = vadd.f32 0.0, %v687
        %v689 = vpop.f32.mrb[0].mxu0
        %v690 = vadd.f32 0.0, %v689
        %691 = vdwg.mxu0
        %692 = vmatprep.subr.mxu0 0.0
        %693 = vmatpush1.msra.mxu0 %v619
        %694 = vmatprep.subr.mxu0 0.0
        %695 = vmatpush1.msra.mxu0 0.0
        %696 = vmatprep.subr.mxu0 0.0
        %697 = vmatpush1.msra.mxu0 0.0
        %698 = vmatprep.subr.mxu0 0.0
        %699 = vmatpush1.msra.mxu0 0.0
        %700 = vmatprep.subr.mxu0 0.0
        %701 = vmatpush1.msra.mxu0 0.0
        %702 = vmatprep.subr.mxu0 0.0
        %703 = vmatpush1.msra.mxu0 0.0
        %704 = vmatprep.subr.mxu0 0.0
        %705 = vmatpush1.msra.mxu0 0.0
        %706 = vmatprep.subr.mxu0 0.0
        %707 = vmatpush1.msra.mxu0 0.0
        %708 = vmatprep.subr.mxu0 0.0
        %709 = vmatpush1.msra.mxu0 0.0
        %710 = vmatprep.subr.mxu0 0.0
        %711 = vmatpush1.msra.mxu0 0.0
        %712 = vmatprep.subr.mxu0 0.0
        %713 = vmatpush1.msra.mxu0 0.0
        %714 = vmatprep.subr.mxu0 0.0
        %715 = vmatpush1.msra.mxu0 0.0
        %716 = vmatprep.subr.mxu0 0.0
        %717 = vmatpush1.msra.mxu0 0.0
        %718 = vmatprep.subr.mxu0 0.0
        %719 = vmatpush1.msra.mxu0 0.0
        %720 = vmatprep.subr.mxu0 0.0
        %721 = vmatpush1.msra.mxu0 0.0
        %722 = vmatprep.subr.mxu0 0.0
        %723 = vmatpush1.msra.mxu0 0.0
        %724 = vmatprep.subr.mxu0 0.0
        %725 = vmatpush1.msra.mxu0 0.0
        %726 = vmatprep.subr.mxu0 0.0
        %727 = vmatpush1.msra.mxu0 0.0
        %728 = vmatprep.subr.mxu0 0.0
        %729 = vmatpush1.msra.mxu0 0.0
        %730 = vmatprep.subr.mxu0 0.0
        %731 = vmatpush1.msra.mxu0 0.0
        %732 = vmatprep.subr.mxu0 0.0
        %733 = vmatpush1.msra.mxu0 0.0
        %734 = vmatprep.subr.mxu0 0.0
        %735 = vmatpush1.msra.mxu0 0.0
        %736 = vmatprep.subr.mxu0 0.0
        %737 = vmatpush1.msra.mxu0 0.0
        %738 = vmatprep.subr.mxu0 0.0
        %739 = vmatpush1.msra.mxu0 0.0
        %740 = vmatprep.subr.mxu0 0.0
        %741 = vmatpush1.msra.mxu0 0.0
        %742 = vmatprep.subr.mxu0 0.0
        %743 = vmatpush1.msra.mxu0 0.0
        %744 = vmatprep.subr.mxu0 0.0
        %745 = vmatpush1.msra.mxu0 0.0
        %746 = vmatprep.subr.mxu0 0.0
        %747 = vmatpush1.msra.mxu0 0.0
        %748 = vmatprep.subr.mxu0 0.0
        %749 = vmatpush1.msra.mxu0 0.0
        %750 = vmatprep.subr.mxu0 0.0
        %751 = vmatpush1.msra.mxu0 0.0
        %752 = vmatprep.subr.mxu0 0.0
        %753 = vmatpush1.msra.mxu0 0.0
        %754 = vmatprep.subr.mxu0 0.0
        %755 = vmatpush1.msra.mxu0 0.0
        %756 = vmatprep.mubr.f32.mxu0 0.0
        %757 = vmatmul.mubr.f32.gmra.mrb[0].mxu0 %v613
        %v758 = vpop.f32.mrb[0].mxu0
        %v759 = vadd.f32 0.0, %v758
        %v760 = vpop.f32.mrb[0].mxu0
        %761 = vdwg.mxu0
        %v762 = vadd.f32 %v524, %v688
        %v763 = vadd.f32 %v526, %v690
        %v764 = vadd.f32 %v595, %v759
        %s765 = scalar_lea.vmem %s2, 24
        %v766 = vld [vmem:[%s765] sm:$0xff]
        %767 = vrot.lane.b32.xlu0 %v273, 110
        %v768 = vpop.permute.xlu0 %767
        %769 = vrot.lane.b32.xlu0 %v279, 110
        %v770 = vpop.permute.xlu0 %769
        %771 = vrot.lane.b32.xlu0 %v274, 110
        %v772 = vpop.permute.xlu0 %771
        %773 = vrot.lane.b32.xlu0 %v276, 110
        %v774 = vpop.permute.xlu0 %773
        %vm775 = vcmask 900096
        %v776 = vsel %vm775, %v768, %v770
        %v777 = vsel %vm775, %v770, %v772
        %v778 = vsel %vm775, %v772, %v774
        %v780 = vsel %vm296, %v766, 0
        %v782 = vsel %vm300, %v776, 0
        %v784 = vsel %vm300, %v777, 0
        %v786 = vsel %vm300, %v778, 0
        %788 = vmatprep.subr.mxu0 %v784
        %789 = vmatpush1.msra.mxu0 %v782
        %790 = vmatprep.subr.mxu0 0.0
        %791 = vmatpush1.msra.mxu0 0.0
        %792 = vmatprep.subr.mxu0 0.0
        %793 = vmatpush1.msra.mxu0 0.0
        %794 = vmatprep.subr.mxu0 0.0
        %795 = vmatpush1.msra.mxu0 0.0
        %796 = vmatprep.subr.mxu0 0.0
        %797 = vmatpush1.msra.mxu0 0.0
        %798 = vmatprep.subr.mxu0 0.0
        %799 = vmatpush1.msra.mxu0 0.0
        %800 = vmatprep.subr.mxu0 0.0
        %801 = vmatpush1.msra.mxu0 0.0
        %802 = vmatprep.subr.mxu0 0.0
        %803 = vmatpush1.msra.mxu0 0.0
        %804 = vmatprep.subr.mxu0 0.0
        %805 = vmatpush1.msra.mxu0 0.0
        %806 = vmatprep.subr.mxu0 0.0
        %807 = vmatpush1.msra.mxu0 0.0
        %808 = vmatprep.subr.mxu0 0.0
        %809 = vmatpush1.msra.mxu0 0.0
        %810 = vmatprep.subr.mxu0 0.0
        %811 = vmatpush1.msra.mxu0 0.0
        %812 = vmatprep.subr.mxu0 0.0
        %813 = vmatpush1.msra.mxu0 0.0
        %814 = vmatprep.subr.mxu0 0.0
        %815 = vmatpush1.msra.mxu0 0.0
        %816 = vmatprep.subr.mxu0 0.0
        %817 = vmatpush1.msra.mxu0 0.0
        %818 = vmatprep.subr.mxu0 0.0
        %819 = vmatpush1.msra.mxu0 0.0
        %820 = vmatprep.subr.mxu0 0.0
        %821 = vmatpush1.msra.mxu0 0.0
        %822 = vmatprep.subr.mxu0 0.0
        %823 = vmatpush1.msra.mxu0 0.0
        %824 = vmatprep.subr.mxu0 0.0
        %825 = vmatpush1.msra.mxu0 0.0
        %826 = vmatprep.subr.mxu0 0.0
        %827 = vmatpush1.msra.mxu0 0.0
        %828 = vmatprep.subr.mxu0 0.0
        %829 = vmatpush1.msra.mxu0 0.0
        %830 = vmatprep.subr.mxu0 0.0
        %831 = vmatpush1.msra.mxu0 0.0
        %832 = vmatprep.subr.mxu0 0.0
        %833 = vmatpush1.msra.mxu0 0.0
        %834 = vmatprep.subr.mxu0 0.0
        %835 = vmatpush1.msra.mxu0 0.0
        %836 = vmatprep.subr.mxu0 0.0
        %837 = vmatpush1.msra.mxu0 0.0
        %838 = vmatprep.subr.mxu0 0.0
        %839 = vmatpush1.msra.mxu0 0.0
        %840 = vmatprep.subr.mxu0 0.0
        %841 = vmatpush1.msra.mxu0 0.0
        %842 = vmatprep.subr.mxu0 0.0
        %843 = vmatpush1.msra.mxu0 0.0
        %844 = vmatprep.subr.mxu0 0.0
        %845 = vmatpush1.msra.mxu0 0.0
        %846 = vmatprep.subr.mxu0 0.0
        %847 = vmatpush1.msra.mxu0 0.0
        %848 = vmatprep.subr.mxu0 0.0
        %849 = vmatpush1.msra.mxu0 0.0
        %850 = vmatprep.subr.mxu0 0.0
        %851 = vmatpush1.msra.mxu0 0.0
        %852 = vmatprep.mubr.f32.mxu0 0.0
        %853 = vmatmul.mubr.f32.gmra.mrb[0].mxu0 %v780
        %v854 = vpop.f32.mrb[0].mxu0
        %v855 = vadd.f32 0.0, %v854
        %v856 = vpop.f32.mrb[0].mxu0
        %v857 = vadd.f32 0.0, %v856
        %858 = vdwg.mxu0
        %859 = vmatprep.subr.mxu0 0.0
        %860 = vmatpush1.msra.mxu0 %v786
        %861 = vmatprep.subr.mxu0 0.0
        %862 = vmatpush1.msra.mxu0 0.0
        %863 = vmatprep.subr.mxu0 0.0
        %864 = vmatpush1.msra.mxu0 0.0
        %865 = vmatprep.subr.mxu0 0.0
        %866 = vmatpush1.msra.mxu0 0.0
        %867 = vmatprep.subr.mxu0 0.0
        %868 = vmatpush1.msra.mxu0 0.0
        %869 = vmatprep.subr.mxu0 0.0
        %870 = vmatpush1.msra.mxu0 0.0
        %871 = vmatprep.subr.mxu0 0.0
        %872 = vmatpush1.msra.mxu0 0.0
        %873 = vmatprep.subr.mxu0 0.0
        %874 = vmatpush1.msra.mxu0 0.0
        %875 = vmatprep.subr.mxu0 0.0
        %876 = vmatpush1.msra.mxu0 0.0
        %877 = vmatprep.subr.mxu0 0.0
        %878 = vmatpush1.msra.mxu0 0.0
        %879 = vmatprep.subr.mxu0 0.0
        %880 = vmatpush1.msra.mxu0 0.0
        %881 = vmatprep.subr.mxu0 0.0
        %882 = vmatpush1.msra.mxu0 0.0
        %883 = vmatprep.subr.mxu0 0.0
        %884 = vmatpush1.msra.mxu0 0.0
        %885 = vmatprep.subr.mxu0 0.0
        %886 = vmatpush1.msra.mxu0 0.0
        %887 = vmatprep.subr.mxu0 0.0
        %888 = vmatpush1.msra.mxu0 0.0
        %889 = vmatprep.subr.mxu0 0.0
        %890 = vmatpush1.msra.mxu0 0.0
        %891 = vmatprep.subr.mxu0 0.0
        %892 = vmatpush1.msra.mxu0 0.0
        %893 = vmatprep.subr.mxu0 0.0
        %894 = vmatpush1.msra.mxu0 0.0
        %895 = vmatprep.subr.mxu0 0.0
        %896 = vmatpush1.msra.mxu0 0.0
        %897 = vmatprep.subr.mxu0 0.0
        %898 = vmatpush1.msra.mxu0 0.0
        %899 = vmatprep.subr.mxu0 0.0
        %900 = vmatpush1.msra.mxu0 0.0
        %901 = vmatprep.subr.mxu0 0.0
        %902 = vmatpush1.msra.mxu0 0.0
        %903 = vmatprep.subr.mxu0 0.0
        %904 = vmatpush1.msra.mxu0 0.0
        %905 = vmatprep.subr.mxu0 0.0
        %906 = vmatpush1.msra.mxu0 0.0
        %907 = vmatprep.subr.mxu0 0.0
        %908 = vmatpush1.msra.mxu0 0.0
        %909 = vmatprep.subr.mxu0 0.0
        %910 = vmatpush1.msra.mxu0 0.0
        %911 = vmatprep.subr.mxu0 0.0
        %912 = vmatpush1.msra.mxu0 0.0
        %913 = vmatprep.subr.mxu0 0.0
        %914 = vmatpush1.msra.mxu0 0.0
        %915 = vmatprep.subr.mxu0 0.0
        %916 = vmatpush1.msra.mxu0 0.0
        %917 = vmatprep.subr.mxu0 0.0
        %918 = vmatpush1.msra.mxu0 0.0
        %919 = vmatprep.subr.mxu0 0.0
        %920 = vmatpush1.msra.mxu0 0.0
        %921 = vmatprep.subr.mxu0 0.0
        %922 = vmatpush1.msra.mxu0 0.0
        %923 = vmatprep.mubr.f32.mxu0 0.0
        %924 = vmatmul.mubr.f32.gmra.mrb[0].mxu0 %v780
        %v925 = vpop.f32.mrb[0].mxu0
        %v926 = vadd.f32 0.0, %v925
        %v927 = vpop.f32.mrb[0].mxu0
        %928 = vdwg.mxu0
        %v929 = vadd.f32 %v762, %v855
        %v930 = vadd.f32 %v763, %v857
        %v931 = vadd.f32 %v764, %v926
        %s932 = scalar_lea.vmem %s2, 32
        %v933 = vld [vmem:[%s932] sm:$0xff]
        %934 = vrot.lane.b32.xlu0 %v273, 109
        %v935 = vpop.permute.xlu0 %934
        %936 = vrot.lane.b32.xlu0 %v279, 109
        %v937 = vpop.permute.xlu0 %936
        %938 = vrot.lane.b32.xlu0 %v274, 109
        %v939 = vpop.permute.xlu0 %938
        %940 = vrot.lane.b32.xlu0 %v276, 109
        %v941 = vpop.permute.xlu0 %940
        %vm942 = vcmask 891904
        %v943 = vsel %vm942, %v935, %v937
        %v944 = vsel %vm942, %v937, %v939
        %v945 = vsel %vm942, %v939, %v941
        %v947 = vsel %vm296, %v933, 0
        %v949 = vsel %vm300, %v943, 0
        %v951 = vsel %vm300, %v944, 0
        %v953 = vsel %vm300, %v945, 0
        %955 = vmatprep.subr.mxu0 %v951
        %956 = vmatpush1.msra.mxu0 %v949
        %957 = vmatprep.subr.mxu0 0.0
        %958 = vmatpush1.msra.mxu0 0.0
        %959 = vmatprep.subr.mxu0 0.0
        %960 = vmatpush1.msra.mxu0 0.0
        %961 = vmatprep.subr.mxu0 0.0
        %962 = vmatpush1.msra.mxu0 0.0
        %963 = vmatprep.subr.mxu0 0.0
        %964 = vmatpush1.msra.mxu0 0.0
        %965 = vmatprep.subr.mxu0 0.0
        %966 = vmatpush1.msra.mxu0 0.0
        %967 = vmatprep.subr.mxu0 0.0
        %968 = vmatpush1.msra.mxu0 0.0
        %969 = vmatprep.subr.mxu0 0.0
        %970 = vmatpush1.msra.mxu0 0.0
        %971 = vmatprep.subr.mxu0 0.0
        %972 = vmatpush1.msra.mxu0 0.0
        %973 = vmatprep.subr.mxu0 0.0
        %974 = vmatpush1.msra.mxu0 0.0
        %975 = vmatprep.subr.mxu0 0.0
        %976 = vmatpush1.msra.mxu0 0.0
        %977 = vmatprep.subr.mxu0 0.0
        %978 = vmatpush1.msra.mxu0 0.0
        %979 = vmatprep.subr.mxu0 0.0
        %980 = vmatpush1.msra.mxu0 0.0
        %981 = vmatprep.subr.mxu0 0.0
        %982 = vmatpush1.msra.mxu0 0.0
        %983 = vmatprep.subr.mxu0 0.0
        %984 = vmatpush1.msra.mxu0 0.0
        %985 = vmatprep.subr.mxu0 0.0
        %986 = vmatpush1.msra.mxu0 0.0
        %987 = vmatprep.subr.mxu0 0.0
        %988 = vmatpush1.msra.mxu0 0.0
        %989 = vmatprep.subr.mxu0 0.0
        %990 = vmatpush1.msra.mxu0 0.0
        %991 = vmatprep.subr.mxu0 0.0
        %992 = vmatpush1.msra.mxu0 0.0
        %993 = vmatprep.subr.mxu0 0.0
        %994 = vmatpush1.msra.mxu0 0.0
        %995 = vmatprep.subr.mxu0 0.0
        %996 = vmatpush1.msra.mxu0 0.0
        %997 = vmatprep.subr.mxu0 0.0
        %998 = vmatpush1.msra.mxu0 0.0
        %999 = vmatprep.subr.mxu0 0.0
        %1000 = vmatpush1.msra.mxu0 0.0
        %1001 = vmatprep.subr.mxu0 0.0
        %1002 = vmatpush1.msra.mxu0 0.0
        %1003 = vmatprep.subr.mxu0 0.0
        %1004 = vmatpush1.msra.mxu0 0.0
        %1005 = vmatprep.subr.mxu0 0.0
        %1006 = vmatpush1.msra.mxu0 0.0
        %1007 = vmatprep.subr.mxu0 0.0
        %1008 = vmatpush1.msra.mxu0 0.0
        %1009 = vmatprep.subr.mxu0 0.0
        %1010 = vmatpush1.msra.mxu0 0.0
        %1011 = vmatprep.subr.mxu0 0.0
        %1012 = vmatpush1.msra.mxu0 0.0
        %1013 = vmatprep.subr.mxu0 0.0
        %1014 = vmatpush1.msra.mxu0 0.0
        %1015 = vmatprep.subr.mxu0 0.0
        %1016 = vmatpush1.msra.mxu0 0.0
        %1017 = vmatprep.subr.mxu0 0.0
        %1018 = vmatpush1.msra.mxu0 0.0
        %1019 = vmatprep.mubr.f32.mxu0 0.0
        %1020 = vmatmul.mubr.f32.gmra.mrb[0].mxu0 %v947
        %v1021 = vpop.f32.mrb[0].mxu0
        %v1022 = vadd.f32 0.0, %v1021
        %v1023 = vpop.f32.mrb[0].mxu0
        %v1024 = vadd.f32 0.0, %v1023
        %1025 = vdwg.mxu0
        %1026 = vmatprep.subr.mxu0 0.0
        %1027 = vmatpush1.msra.mxu0 %v953
        %1028 = vmatprep.subr.mxu0 0.0
        %1029 = vmatpush1.msra.mxu0 0.0
        %1030 = vmatprep.subr.mxu0 0.0
        %1031 = vmatpush1.msra.mxu0 0.0
        %1032 = vmatprep.subr.mxu0 0.0
        %1033 = vmatpush1.msra.mxu0 0.0
        %1034 = vmatprep.subr.mxu0 0.0
        %1035 = vmatpush1.msra.mxu0 0.0
        %1036 = vmatprep.subr.mxu0 0.0
        %1037 = vmatpush1.msra.mxu0 0.0
        %1038 = vmatprep.subr.mxu0 0.0
        %1039 = vmatpush1.msra.mxu0 0.0
        %1040 = vmatprep.subr.mxu0 0.0
        %1041 = vmatpush1.msra.mxu0 0.0
        %1042 = vmatprep.subr.mxu0 0.0
        %1043 = vmatpush1.msra.mxu0 0.0
        %1044 = vmatprep.subr.mxu0 0.0
        %1045 = vmatpush1.msra.mxu0 0.0
        %1046 = vmatprep.subr.mxu0 0.0
        %1047 = vmatpush1.msra.mxu0 0.0
        %1048 = vmatprep.subr.mxu0 0.0
        %1049 = vmatpush1.msra.mxu0 0.0
        %1050 = vmatprep.subr.mxu0 0.0
        %1051 = vmatpush1.msra.mxu0 0.0
        %1052 = vmatprep.subr.mxu0 0.0
        %1053 = vmatpush1.msra.mxu0 0.0
        %1054 = vmatprep.subr.mxu0 0.0
        %1055 = vmatpush1.msra.mxu0 0.0
        %1056 = vmatprep.subr.mxu0 0.0
        %1057 = vmatpush1.msra.mxu0 0.0
        %1058 = vmatprep.subr.mxu0 0.0
        %1059 = vmatpush1.msra.mxu0 0.0
        %1060 = vmatprep.subr.mxu0 0.0
        %1061 = vmatpush1.msra.mxu0 0.0
        %1062 = vmatprep.subr.mxu0 0.0
        %1063 = vmatpush1.msra.mxu0 0.0
        %1064 = vmatprep.subr.mxu0 0.0
        %1065 = vmatpush1.msra.mxu0 0.0
        %1066 = vmatprep.subr.mxu0 0.0
        %1067 = vmatpush1.msra.mxu0 0.0
        %1068 = vmatprep.subr.mxu0 0.0
        %1069 = vmatpush1.msra.mxu0 0.0
        %1070 = vmatprep.subr.mxu0 0.0
        %1071 = vmatpush1.msra.mxu0 0.0
        %1072 = vmatprep.subr.mxu0 0.0
        %1073 = vmatpush1.msra.mxu0 0.0
        %1074 = vmatprep.subr.mxu0 0.0
        %1075 = vmatpush1.msra.mxu0 0.0
        %1076 = vmatprep.subr.mxu0 0.0
        %1077 = vmatpush1.msra.mxu0 0.0
        %1078 = vmatprep.subr.mxu0 0.0
        %1079 = vmatpush1.msra.mxu0 0.0
        %1080 = vmatprep.subr.mxu0 0.0
        %1081 = vmatpush1.msra.mxu0 0.0
        %1082 = vmatprep.subr.mxu0 0.0
        %1083 = vmatpush1.msra.mxu0 0.0
        %1084 = vmatprep.subr.mxu0 0.0
        %1085 = vmatpush1.msra.mxu0 0.0
        %1086 = vmatprep.subr.mxu0 0.0
        %1087 = vmatpush1.msra.mxu0 0.0
        %1088 = vmatprep.subr.mxu0 0.0
        %1089 = vmatpush1.msra.mxu0 0.0
        %1090 = vmatprep.mubr.f32.mxu0 0.0
        %1091 = vmatmul.mubr.f32.gmra.mrb[0].mxu0 %v947
        %v1092 = vpop.f32.mrb[0].mxu0
        %v1093 = vadd.f32 0.0, %v1092
        %v1094 = vpop.f32.mrb[0].mxu0
        %1095 = vdwg.mxu0
        %v1096 = vadd.f32 %v929, %v1022
        %v1097 = vadd.f32 %v930, %v1024
        %v1098 = vadd.f32 %v931, %v1093
        %s1099 = scalar_lea.vmem %s2, 40
        %v1100 = vld [vmem:[%s1099] sm:$0xff]
        %1101 = vrot.lane.b32.xlu0 %v273, 108
        %v1102 = vpop.permute.xlu0 %1101
        %1103 = vrot.lane.b32.xlu0 %v279, 108
        %v1104 = vpop.permute.xlu0 %1103
        %1105 = vrot.lane.b32.xlu0 %v274, 108
        %v1106 = vpop.permute.xlu0 %1105
        %1107 = vrot.lane.b32.xlu0 %v276, 108
        %v1108 = vpop.permute.xlu0 %1107
        %vm1109 = vcmask 883712
        %v1110 = vsel %vm1109, %v1102, %v1104
        %v1111 = vsel %vm1109, %v1104, %v1106
        %v1112 = vsel %vm1109, %v1106, %v1108
        %v1114 = vsel %vm296, %v1100, 0
        %v1116 = vsel %vm300, %v1110, 0
        %v1118 = vsel %vm300, %v1111, 0
        %v1120 = vsel %vm300, %v1112, 0
        %1122 = vmatprep.subr.mxu0 %v1118
        %1123 = vmatpush1.msra.mxu0 %v1116
        %1124 = vmatprep.subr.mxu0 0.0
        %1125 = vmatpush1.msra.mxu0 0.0
        %1126 = vmatprep.subr.mxu0 0.0
        %1127 = vmatpush1.msra.mxu0 0.0
        %1128 = vmatprep.subr.mxu0 0.0
        %1129 = vmatpush1.msra.mxu0 0.0
        %1130 = vmatprep.subr.mxu0 0.0
        %1131 = vmatpush1.msra.mxu0 0.0
        %1132 = vmatprep.subr.mxu0 0.0
        %1133 = vmatpush1.msra.mxu0 0.0
        %1134 = vmatprep.subr.mxu0 0.0
        %1135 = vmatpush1.msra.mxu0 0.0
        %1136 = vmatprep.subr.mxu0 0.0
        %1137 = vmatpush1.msra.mxu0 0.0
        %1138 = vmatprep.subr.mxu0 0.0
        %1139 = vmatpush1.msra.mxu0 0.0
        %1140 = vmatprep.subr.mxu0 0.0
        %1141 = vmatpush1.msra.mxu0 0.0
        %1142 = vmatprep.subr.mxu0 0.0
        %1143 = vmatpush1.msra.mxu0 0.0
        %1144 = vmatprep.subr.mxu0 0.0
        %1145 = vmatpush1.msra.mxu0 0.0
        %1146 = vmatprep.subr.mxu0 0.0
        %1147 = vmatpush1.msra.mxu0 0.0
        %1148 = vmatprep.subr.mxu0 0.0
        %1149 = vmatpush1.msra.mxu0 0.0
        %1150 = vmatprep.subr.mxu0 0.0
        %1151 = vmatpush1.msra.mxu0 0.0
        %1152 = vmatprep.subr.mxu0 0.0
        %1153 = vmatpush1.msra.mxu0 0.0
        %1154 = vmatprep.subr.mxu0 0.0
        %1155 = vmatpush1.msra.mxu0 0.0
        %1156 = vmatprep.subr.mxu0 0.0
        %1157 = vmatpush1.msra.mxu0 0.0
        %1158 = vmatprep.subr.mxu0 0.0
        %1159 = vmatpush1.msra.mxu0 0.0
        %1160 = vmatprep.subr.mxu0 0.0
        %1161 = vmatpush1.msra.mxu0 0.0
        %1162 = vmatprep.subr.mxu0 0.0
        %1163 = vmatpush1.msra.mxu0 0.0
        %1164 = vmatprep.subr.mxu0 0.0
        %1165 = vmatpush1.msra.mxu0 0.0
        %1166 = vmatprep.subr.mxu0 0.0
        %1167 = vmatpush1.msra.mxu0 0.0
        %1168 = vmatprep.subr.mxu0 0.0
        %1169 = vmatpush1.msra.mxu0 0.0
        %1170 = vmatprep.subr.mxu0 0.0
        %1171 = vmatpush1.msra.mxu0 0.0
        %1172 = vmatprep.subr.mxu0 0.0
        %1173 = vmatpush1.msra.mxu0 0.0
        %1174 = vmatprep.subr.mxu0 0.0
        %1175 = vmatpush1.msra.mxu0 0.0
        %1176 = vmatprep.subr.mxu0 0.0
        %1177 = vmatpush1.msra.mxu0 0.0
        %1178 = vmatprep.subr.mxu0 0.0
        %1179 = vmatpush1.msra.mxu0 0.0
        %1180 = vmatprep.subr.mxu0 0.0
        %1181 = vmatpush1.msra.mxu0 0.0
        %1182 = vmatprep.subr.mxu0 0.0
        %1183 = vmatpush1.msra.mxu0 0.0
        %1184 = vmatprep.subr.mxu0 0.0
        %1185 = vmatpush1.msra.mxu0 0.0
        %1186 = vmatprep.mubr.f32.mxu0 0.0
        %1187 = vmatmul.mubr.f32.gmra.mrb[0].mxu0 %v1114
        %v1188 = vpop.f32.mrb[0].mxu0
        %v1189 = vadd.f32 0.0, %v1188
        %v1190 = vpop.f32.mrb[0].mxu0
        %v1191 = vadd.f32 0.0, %v1190
        %1192 = vdwg.mxu0
        %1193 = vmatprep.subr.mxu0 0.0
        %1194 = vmatpush1.msra.mxu0 %v1120
        %1195 = vmatprep.subr.mxu0 0.0
        %1196 = vmatpush1.msra.mxu0 0.0
        %1197 = vmatprep.subr.mxu0 0.0
        %1198 = vmatpush1.msra.mxu0 0.0
        %1199 = vmatprep.subr.mxu0 0.0
        %1200 = vmatpush1.msra.mxu0 0.0
        %1201 = vmatprep.subr.mxu0 0.0
        %1202 = vmatpush1.msra.mxu0 0.0
        %1203 = vmatprep.subr.mxu0 0.0
        %1204 = vmatpush1.msra.mxu0 0.0
        %1205 = vmatprep.subr.mxu0 0.0
        %1206 = vmatpush1.msra.mxu0 0.0
        %1207 = vmatprep.subr.mxu0 0.0
        %1208 = vmatpush1.msra.mxu0 0.0
        %1209 = vmatprep.subr.mxu0 0.0
        %1210 = vmatpush1.msra.mxu0 0.0
        %1211 = vmatprep.subr.mxu0 0.0
        %1212 = vmatpush1.msra.mxu0 0.0
        %1213 = vmatprep.subr.mxu0 0.0
        %1214 = vmatpush1.msra.mxu0 0.0
        %1215 = vmatprep.subr.mxu0 0.0
        %1216 = vmatpush1.msra.mxu0 0.0
        %1217 = vmatprep.subr.mxu0 0.0
        %1218 = vmatpush1.msra.mxu0 0.0
        %1219 = vmatprep.subr.mxu0 0.0
        %1220 = vmatpush1.msra.mxu0 0.0
        %1221 = vmatprep.subr.mxu0 0.0
        %1222 = vmatpush1.msra.mxu0 0.0
        %1223 = vmatprep.subr.mxu0 0.0
        %1224 = vmatpush1.msra.mxu0 0.0
        %1225 = vmatprep.subr.mxu0 0.0
        %1226 = vmatpush1.msra.mxu0 0.0
        %1227 = vmatprep.subr.mxu0 0.0
        %1228 = vmatpush1.msra.mxu0 0.0
        %1229 = vmatprep.subr.mxu0 0.0
        %1230 = vmatpush1.msra.mxu0 0.0
        %1231 = vmatprep.subr.mxu0 0.0
        %1232 = vmatpush1.msra.mxu0 0.0
        %1233 = vmatprep.subr.mxu0 0.0
        %1234 = vmatpush1.msra.mxu0 0.0
        %1235 = vmatprep.subr.mxu0 0.0
        %1236 = vmatpush1.msra.mxu0 0.0
        %1237 = vmatprep.subr.mxu0 0.0
        %1238 = vmatpush1.msra.mxu0 0.0
        %1239 = vmatprep.subr.mxu0 0.0
        %1240 = vmatpush1.msra.mxu0 0.0
        %1241 = vmatprep.subr.mxu0 0.0
        %1242 = vmatpush1.msra.mxu0 0.0
        %1243 = vmatprep.subr.mxu0 0.0
        %1244 = vmatpush1.msra.mxu0 0.0
        %1245 = vmatprep.subr.mxu0 0.0
        %1246 = vmatpush1.msra.mxu0 0.0
        %1247 = vmatprep.subr.mxu0 0.0
        %1248 = vmatpush1.msra.mxu0 0.0
        %1249 = vmatprep.subr.mxu0 0.0
        %1250 = vmatpush1.msra.mxu0 0.0
        %1251 = vmatprep.subr.mxu0 0.0
        %1252 = vmatpush1.msra.mxu0 0.0
        %1253 = vmatprep.subr.mxu0 0.0
        %1254 = vmatpush1.msra.mxu0 0.0
        %1255 = vmatprep.subr.mxu0 0.0
        %1256 = vmatpush1.msra.mxu0 0.0
        %1257 = vmatprep.mubr.f32.mxu0 0.0
        %1258 = vmatmul.mubr.f32.gmra.mrb[0].mxu0 %v1114
        %v1259 = vpop.f32.mrb[0].mxu0
        %v1260 = vadd.f32 0.0, %v1259
        %v1261 = vpop.f32.mrb[0].mxu0
        %1262 = vdwg.mxu0
        %v1263 = vadd.f32 %v1096, %v1189
        %v1264 = vadd.f32 %v1097, %v1191
        %v1265 = vadd.f32 %v1098, %v1260
        %s1266 = scalar_lea.vmem %s2, 48
        %v1267 = vld [vmem:[%s1266] sm:$0xff]
        %1268 = vrot.lane.b32.xlu0 %v273, 92
        %v1269 = vpop.permute.xlu0 %1268
        %1270 = vrot.lane.b32.xlu0 %v279, 92
        %v1271 = vpop.permute.xlu0 %1270
        %1272 = vrot.lane.b32.xlu0 %v274, 92
        %v1273 = vpop.permute.xlu0 %1272
        %1274 = vrot.lane.b32.xlu0 %v276, 92
        %v1275 = vpop.permute.xlu0 %1274
        %vm1276 = vcmask 752640
        %v1277 = vsel %vm1276, %v1269, %v1271
        %v1278 = vsel %vm1276, %v1271, %v1273
        %v1279 = vsel %vm1276, %v1273, %v1275
        %v1281 = vsel %vm296, %v1267, 0
        %v1283 = vsel %vm300, %v1277, 0
        %v1285 = vsel %vm300, %v1278, 0
        %v1287 = vsel %vm300, %v1279, 0
        %1289 = vmatprep.subr.mxu0 %v1285
        %1290 = vmatpush1.msra.mxu0 %v1283
        %1291 = vmatprep.subr.mxu0 0.0
        %1292 = vmatpush1.msra.mxu0 0.0
        %1293 = vmatprep.subr.mxu0 0.0
        %1294 = vmatpush1.msra.mxu0 0.0
        %1295 = vmatprep.subr.mxu0 0.0
        %1296 = vmatpush1.msra.mxu0 0.0
        %1297 = vmatprep.subr.mxu0 0.0
        %1298 = vmatpush1.msra.mxu0 0.0
        %1299 = vmatprep.subr.mxu0 0.0
        %1300 = vmatpush1.msra.mxu0 0.0
        %1301 = vmatprep.subr.mxu0 0.0
        %1302 = vmatpush1.msra.mxu0 0.0
        %1303 = vmatprep.subr.mxu0 0.0
        %1304 = vmatpush1.msra.mxu0 0.0
        %1305 = vmatprep.subr.mxu0 0.0
        %1306 = vmatpush1.msra.mxu0 0.0
        %1307 = vmatprep.subr.mxu0 0.0
        %1308 = vmatpush1.msra.mxu0 0.0
        %1309 = vmatprep.subr.mxu0 0.0
        %1310 = vmatpush1.msra.mxu0 0.0
        %1311 = vmatprep.subr.mxu0 0.0
        %1312 = vmatpush1.msra.mxu0 0.0
        %1313 = vmatprep.subr.mxu0 0.0
        %1314 = vmatpush1.msra.mxu0 0.0
        %1315 = vmatprep.subr.mxu0 0.0
        %1316 = vmatpush1.msra.mxu0 0.0
        %1317 = vmatprep.subr.mxu0 0.0
        %1318 = vmatpush1.msra.mxu0 0.0
        %1319 = vmatprep.subr.mxu0 0.0
        %1320 = vmatpush1.msra.mxu0 0.0
        %1321 = vmatprep.subr.mxu0 0.0
        %1322 = vmatpush1.msra.mxu0 0.0
        %1323 = vmatprep.subr.mxu0 0.0
        %1324 = vmatpush1.msra.mxu0 0.0
        %1325 = vmatprep.subr.mxu0 0.0
        %1326 = vmatpush1.msra.mxu0 0.0
        %1327 = vmatprep.subr.mxu0 0.0
        %1328 = vmatpush1.msra.mxu0 0.0
        %1329 = vmatprep.subr.mxu0 0.0
        %1330 = vmatpush1.msra.mxu0 0.0
        %1331 = vmatprep.subr.mxu0 0.0
        %1332 = vmatpush1.msra.mxu0 0.0
        %1333 = vmatprep.subr.mxu0 0.0
        %1334 = vmatpush1.msra.mxu0 0.0
        %1335 = vmatprep.subr.mxu0 0.0
        %1336 = vmatpush1.msra.mxu0 0.0
        %1337 = vmatprep.subr.mxu0 0.0
        %1338 = vmatpush1.msra.mxu0 0.0
        %1339 = vmatprep.subr.mxu0 0.0
        %1340 = vmatpush1.msra.mxu0 0.0
        %1341 = vmatprep.subr.mxu0 0.0
        %1342 = vmatpush1.msra.mxu0 0.0
        %1343 = vmatprep.subr.mxu0 0.0
        %1344 = vmatpush1.msra.mxu0 0.0
        %1345 = vmatprep.subr.mxu0 0.0
        %1346 = vmatpush1.msra.mxu0 0.0
        %1347 = vmatprep.subr.mxu0 0.0
        %1348 = vmatpush1.msra.mxu0 0.0
        %1349 = vmatprep.subr.mxu0 0.0
        %1350 = vmatpush1.msra.mxu0 0.0
        %1351 = vmatprep.subr.mxu0 0.0
        %1352 = vmatpush1.msra.mxu0 0.0
        %1353 = vmatprep.mubr.f32.mxu0 0.0
        %1354 = vmatmul.mubr.f32.gmra.mrb[0].mxu0 %v1281
        %v1355 = vpop.f32.mrb[0].mxu0
        %v1356 = vadd.f32 0.0, %v1355
        %v1357 = vpop.f32.mrb[0].mxu0
        %v1358 = vadd.f32 0.0, %v1357
        %1359 = vdwg.mxu0
        %1360 = vmatprep.subr.mxu0 0.0
        %1361 = vmatpush1.msra.mxu0 %v1287
        %1362 = vmatprep.subr.mxu0 0.0
        %1363 = vmatpush1.msra.mxu0 0.0
        %1364 = vmatprep.subr.mxu0 0.0
        %1365 = vmatpush1.msra.mxu0 0.0
        %1366 = vmatprep.subr.mxu0 0.0
        %1367 = vmatpush1.msra.mxu0 0.0
        %1368 = vmatprep.subr.mxu0 0.0
        %1369 = vmatpush1.msra.mxu0 0.0
        %1370 = vmatprep.subr.mxu0 0.0
        %1371 = vmatpush1.msra.mxu0 0.0
        %1372 = vmatprep.subr.mxu0 0.0
        %1373 = vmatpush1.msra.mxu0 0.0
        %1374 = vmatprep.subr.mxu0 0.0
        %1375 = vmatpush1.msra.mxu0 0.0
        %1376 = vmatprep.subr.mxu0 0.0
        %1377 = vmatpush1.msra.mxu0 0.0
        %1378 = vmatprep.subr.mxu0 0.0
        %1379 = vmatpush1.msra.mxu0 0.0
        %1380 = vmatprep.subr.mxu0 0.0
        %1381 = vmatpush1.msra.mxu0 0.0
        %1382 = vmatprep.subr.mxu0 0.0
        %1383 = vmatpush1.msra.mxu0 0.0
        %1384 = vmatprep.subr.mxu0 0.0
        %1385 = vmatpush1.msra.mxu0 0.0
        %1386 = vmatprep.subr.mxu0 0.0
        %1387 = vmatpush1.msra.mxu0 0.0
        %1388 = vmatprep.subr.mxu0 0.0
        %1389 = vmatpush1.msra.mxu0 0.0
        %1390 = vmatprep.subr.mxu0 0.0
        %1391 = vmatpush1.msra.mxu0 0.0
        %1392 = vmatprep.subr.mxu0 0.0
        %1393 = vmatpush1.msra.mxu0 0.0
        %1394 = vmatprep.subr.mxu0 0.0
        %1395 = vmatpush1.msra.mxu0 0.0
        %1396 = vmatprep.subr.mxu0 0.0
        %1397 = vmatpush1.msra.mxu0 0.0
        %1398 = vmatprep.subr.mxu0 0.0
        %1399 = vmatpush1.msra.mxu0 0.0
        %1400 = vmatprep.subr.mxu0 0.0
        %1401 = vmatpush1.msra.mxu0 0.0
        %1402 = vmatprep.subr.mxu0 0.0
        %1403 = vmatpush1.msra.mxu0 0.0
        %1404 = vmatprep.subr.mxu0 0.0
        %1405 = vmatpush1.msra.mxu0 0.0
        %1406 = vmatprep.subr.mxu0 0.0
        %1407 = vmatpush1.msra.mxu0 0.0
        %1408 = vmatprep.subr.mxu0 0.0
        %1409 = vmatpush1.msra.mxu0 0.0
        %1410 = vmatprep.subr.mxu0 0.0
        %1411 = vmatpush1.msra.mxu0 0.0
        %1412 = vmatprep.subr.mxu0 0.0
        %1413 = vmatpush1.msra.mxu0 0.0
        %1414 = vmatprep.subr.mxu0 0.0
        %1415 = vmatpush1.msra.mxu0 0.0
        %1416 = vmatprep.subr.mxu0 0.0
        %1417 = vmatpush1.msra.mxu0 0.0
        %1418 = vmatprep.subr.mxu0 0.0
        %1419 = vmatpush1.msra.mxu0 0.0
        %1420 = vmatprep.subr.mxu0 0.0
        %1421 = vmatpush1.msra.mxu0 0.0
        %1422 = vmatprep.subr.mxu0 0.0
        %1423 = vmatpush1.msra.mxu0 0.0
        %1424 = vmatprep.mubr.f32.mxu0 0.0
        %1425 = vmatmul.mubr.f32.gmra.mrb[0].mxu0 %v1281
        %v1426 = vpop.f32.mrb[0].mxu0
        %v1427 = vadd.f32 0.0, %v1426
        %v1428 = vpop.f32.mrb[0].mxu0
        %1429 = vdwg.mxu0
        %v1430 = vadd.f32 %v1263, %v1356
        %v1431 = vadd.f32 %v1264, %v1358
        %v1432 = vadd.f32 %v1265, %v1427
        %s1433 = scalar_lea.vmem %s2, 56
        %v1434 = vld [vmem:[%s1433] sm:$0xff]
        %1435 = vrot.lane.b32.xlu0 %v273, 91
        %v1436 = vpop.permute.xlu0 %1435
        %1437 = vrot.lane.b32.xlu0 %v279, 91
        %v1438 = vpop.permute.xlu0 %1437
        %1439 = vrot.lane.b32.xlu0 %v274, 91
        %v1440 = vpop.permute.xlu0 %1439
        %1441 = vrot.lane.b32.xlu0 %v276, 91
        %v1442 = vpop.permute.xlu0 %1441
        %vm1443 = vcmask 744448
        %v1444 = vsel %vm1443, %v1436, %v1438
        %v1445 = vsel %vm1443, %v1438, %v1440
        %v1446 = vsel %vm1443, %v1440, %v1442
        %v1448 = vsel %vm296, %v1434, 0
        %v1450 = vsel %vm300, %v1444, 0
        %v1452 = vsel %vm300, %v1445, 0
        %v1454 = vsel %vm300, %v1446, 0
        %1456 = vmatprep.subr.mxu0 %v1452
        %1457 = vmatpush1.msra.mxu0 %v1450
        %1458 = vmatprep.subr.mxu0 0.0
        %1459 = vmatpush1.msra.mxu0 0.0
        %1460 = vmatprep.subr.mxu0 0.0
        %1461 = vmatpush1.msra.mxu0 0.0
        %1462 = vmatprep.subr.mxu0 0.0
        %1463 = vmatpush1.msra.mxu0 0.0
        %1464 = vmatprep.subr.mxu0 0.0
        %1465 = vmatpush1.msra.mxu0 0.0
        %1466 = vmatprep.subr.mxu0 0.0
        %1467 = vmatpush1.msra.mxu0 0.0
        %1468 = vmatprep.subr.mxu0 0.0
        %1469 = vmatpush1.msra.mxu0 0.0
        %1470 = vmatprep.subr.mxu0 0.0
        %1471 = vmatpush1.msra.mxu0 0.0
        %1472 = vmatprep.subr.mxu0 0.0
        %1473 = vmatpush1.msra.mxu0 0.0
        %1474 = vmatprep.subr.mxu0 0.0
        %1475 = vmatpush1.msra.mxu0 0.0
        %1476 = vmatprep.subr.mxu0 0.0
        %1477 = vmatpush1.msra.mxu0 0.0
        %1478 = vmatprep.subr.mxu0 0.0
        %1479 = vmatpush1.msra.mxu0 0.0
        %1480 = vmatprep.subr.mxu0 0.0
        %1481 = vmatpush1.msra.mxu0 0.0
        %1482 = vmatprep.subr.mxu0 0.0
        %1483 = vmatpush1.msra.mxu0 0.0
        %1484 = vmatprep.subr.mxu0 0.0
        %1485 = vmatpush1.msra.mxu0 0.0
        %1486 = vmatprep.subr.mxu0 0.0
        %1487 = vmatpush1.msra.mxu0 0.0
        %1488 = vmatprep.subr.mxu0 0.0
        %1489 = vmatpush1.msra.mxu0 0.0
        %1490 = vmatprep.subr.mxu0 0.0
        %1491 = vmatpush1.msra.mxu0 0.0
        %1492 = vmatprep.subr.mxu0 0.0
        %1493 = vmatpush1.msra.mxu0 0.0
        %1494 = vmatprep.subr.mxu0 0.0
        %1495 = vmatpush1.msra.mxu0 0.0
        %1496 = vmatprep.subr.mxu0 0.0
        %1497 = vmatpush1.msra.mxu0 0.0
        %1498 = vmatprep.subr.mxu0 0.0
        %1499 = vmatpush1.msra.mxu0 0.0
        %1500 = vmatprep.subr.mxu0 0.0
        %1501 = vmatpush1.msra.mxu0 0.0
        %1502 = vmatprep.subr.mxu0 0.0
        %1503 = vmatpush1.msra.mxu0 0.0
        %1504 = vmatprep.subr.mxu0 0.0
        %1505 = vmatpush1.msra.mxu0 0.0
        %1506 = vmatprep.subr.mxu0 0.0
        %1507 = vmatpush1.msra.mxu0 0.0
        %1508 = vmatprep.subr.mxu0 0.0
        %1509 = vmatpush1.msra.mxu0 0.0
        %1510 = vmatprep.subr.mxu0 0.0
        %1511 = vmatpush1.msra.mxu0 0.0
        %1512 = vmatprep.subr.mxu0 0.0
        %1513 = vmatpush1.msra.mxu0 0.0
        %1514 = vmatprep.subr.mxu0 0.0
        %1515 = vmatpush1.msra.mxu0 0.0
        %1516 = vmatprep.subr.mxu0 0.0
        %1517 = vmatpush1.msra.mxu0 0.0
        %1518 = vmatprep.subr.mxu0 0.0
        %1519 = vmatpush1.msra.mxu0 0.0
        %1520 = vmatprep.mubr.f32.mxu0 0.0
        %1521 = vmatmul.mubr.f32.gmra.mrb[0].mxu0 %v1448
        %v1522 = vpop.f32.mrb[0].mxu0
        %v1523 = vadd.f32 0.0, %v1522
        %v1524 = vpop.f32.mrb[0].mxu0
        %v1525 = vadd.f32 0.0, %v1524
        %1526 = vdwg.mxu0
        %1527 = vmatprep.subr.mxu0 0.0
        %1528 = vmatpush1.msra.mxu0 %v1454
        %1529 = vmatprep.subr.mxu0 0.0
        %1530 = vmatpush1.msra.mxu0 0.0
        %1531 = vmatprep.subr.mxu0 0.0
        %1532 = vmatpush1.msra.mxu0 0.0
        %1533 = vmatprep.subr.mxu0 0.0
        %1534 = vmatpush1.msra.mxu0 0.0
        %1535 = vmatprep.subr.mxu0 0.0
        %1536 = vmatpush1.msra.mxu0 0.0
        %1537 = vmatprep.subr.mxu0 0.0
        %1538 = vmatpush1.msra.mxu0 0.0
        %1539 = vmatprep.subr.mxu0 0.0
        %1540 = vmatpush1.msra.mxu0 0.0
        %1541 = vmatprep.subr.mxu0 0.0
        %1542 = vmatpush1.msra.mxu0 0.0
        %1543 = vmatprep.subr.mxu0 0.0
        %1544 = vmatpush1.msra.mxu0 0.0
        %1545 = vmatprep.subr.mxu0 0.0
        %1546 = vmatpush1.msra.mxu0 0.0
        %1547 = vmatprep.subr.mxu0 0.0
        %1548 = vmatpush1.msra.mxu0 0.0
        %1549 = vmatprep.subr.mxu0 0.0
        %1550 = vmatpush1.msra.mxu0 0.0
        %1551 = vmatprep.subr.mxu0 0.0
        %1552 = vmatpush1.msra.mxu0 0.0
        %1553 = vmatprep.subr.mxu0 0.0
        %1554 = vmatpush1.msra.mxu0 0.0
        %1555 = vmatprep.subr.mxu0 0.0
        %1556 = vmatpush1.msra.mxu0 0.0
        %1557 = vmatprep.subr.mxu0 0.0
        %1558 = vmatpush1.msra.mxu0 0.0
        %1559 = vmatprep.subr.mxu0 0.0
        %1560 = vmatpush1.msra.mxu0 0.0
        %1561 = vmatprep.subr.mxu0 0.0
        %1562 = vmatpush1.msra.mxu0 0.0
        %1563 = vmatprep.subr.mxu0 0.0
        %1564 = vmatpush1.msra.mxu0 0.0
        %1565 = vmatprep.subr.mxu0 0.0
        %1566 = vmatpush1.msra.mxu0 0.0
        %1567 = vmatprep.subr.mxu0 0.0
        %1568 = vmatpush1.msra.mxu0 0.0
        %1569 = vmatprep.subr.mxu0 0.0
        %1570 = vmatpush1.msra.mxu0 0.0
        %1571 = vmatprep.subr.mxu0 0.0
        %1572 = vmatpush1.msra.mxu0 0.0
        %1573 = vmatprep.subr.mxu0 0.0
        %1574 = vmatpush1.msra.mxu0 0.0
        %1575 = vmatprep.subr.mxu0 0.0
        %1576 = vmatpush1.msra.mxu0 0.0
        %1577 = vmatprep.subr.mxu0 0.0
        %1578 = vmatpush1.msra.mxu0 0.0
        %1579 = vmatprep.subr.mxu0 0.0
        %1580 = vmatpush1.msra.mxu0 0.0
        %1581 = vmatprep.subr.mxu0 0.0
        %1582 = vmatpush1.msra.mxu0 0.0
        %1583 = vmatprep.subr.mxu0 0.0
        %1584 = vmatpush1.msra.mxu0 0.0
        %1585 = vmatprep.subr.mxu0 0.0
        %1586 = vmatpush1.msra.mxu0 0.0
        %1587 = vmatprep.subr.mxu0 0.0
        %1588 = vmatpush1.msra.mxu0 0.0
        %1589 = vmatprep.subr.mxu0 0.0
        %1590 = vmatpush1.msra.mxu0 0.0
        %1591 = vmatprep.mubr.f32.mxu0 0.0
        %1592 = vmatmul.mubr.f32.gmra.mrb[0].mxu0 %v1448
        %v1593 = vpop.f32.mrb[0].mxu0
        %v1594 = vadd.f32 0.0, %v1593
        %v1595 = vpop.f32.mrb[0].mxu0
        %1596 = vdwg.mxu0
        %v1597 = vadd.f32 %v1430, %v1523
        %v1598 = vadd.f32 %v1431, %v1525
        %v1599 = vadd.f32 %v1432, %v1594
        %s1600 = scalar_lea.vmem %s2, 64
        %v1601 = vld [vmem:[%s1600] sm:$0xff]
        %1602 = vrot.lane.b32.xlu0 %v273, 90
        %v1603 = vpop.permute.xlu0 %1602
        %1604 = vrot.lane.b32.xlu0 %v279, 90
        %v1605 = vpop.permute.xlu0 %1604
        %1606 = vrot.lane.b32.xlu0 %v274, 90
        %v1607 = vpop.permute.xlu0 %1606
        %1608 = vrot.lane.b32.xlu0 %v276, 90
        %v1609 = vpop.permute.xlu0 %1608
        %vm1610 = vcmask 736256
        %v1611 = vsel %vm1610, %v1603, %v1605
        %v1612 = vsel %vm1610, %v1605, %v1607
        %v1613 = vsel %vm1610, %v1607, %v1609
        %v1615 = vsel %vm296, %v1601, 0
        %v1617 = vsel %vm300, %v1611, 0
        %v1619 = vsel %vm300, %v1612, 0
        %v1621 = vsel %vm300, %v1613, 0
        %1623 = vmatprep.subr.mxu0 %v1619
        %1624 = vmatpush1.msra.mxu0 %v1617
        %1625 = vmatprep.subr.mxu0 0.0
        %1626 = vmatpush1.msra.mxu0 0.0
        %1627 = vmatprep.subr.mxu0 0.0
        %1628 = vmatpush1.msra.mxu0 0.0
        %1629 = vmatprep.subr.mxu0 0.0
        %1630 = vmatpush1.msra.mxu0 0.0
        %1631 = vmatprep.subr.mxu0 0.0
        %1632 = vmatpush1.msra.mxu0 0.0
        %1633 = vmatprep.subr.mxu0 0.0
        %1634 = vmatpush1.msra.mxu0 0.0
        %1635 = vmatprep.subr.mxu0 0.0
        %1636 = vmatpush1.msra.mxu0 0.0
        %1637 = vmatprep.subr.mxu0 0.0
        %1638 = vmatpush1.msra.mxu0 0.0
        %1639 = vmatprep.subr.mxu0 0.0
        %1640 = vmatpush1.msra.mxu0 0.0
        %1641 = vmatprep.subr.mxu0 0.0
        %1642 = vmatpush1.msra.mxu0 0.0
        %1643 = vmatprep.subr.mxu0 0.0
        %1644 = vmatpush1.msra.mxu0 0.0
        %1645 = vmatprep.subr.mxu0 0.0
        %1646 = vmatpush1.msra.mxu0 0.0
        %1647 = vmatprep.subr.mxu0 0.0
        %1648 = vmatpush1.msra.mxu0 0.0
        %1649 = vmatprep.subr.mxu0 0.0
        %1650 = vmatpush1.msra.mxu0 0.0
        %1651 = vmatprep.subr.mxu0 0.0
        %1652 = vmatpush1.msra.mxu0 0.0
        %1653 = vmatprep.subr.mxu0 0.0
        %1654 = vmatpush1.msra.mxu0 0.0
        %1655 = vmatprep.subr.mxu0 0.0
        %1656 = vmatpush1.msra.mxu0 0.0
        %1657 = vmatprep.subr.mxu0 0.0
        %1658 = vmatpush1.msra.mxu0 0.0
        %1659 = vmatprep.subr.mxu0 0.0
        %1660 = vmatpush1.msra.mxu0 0.0
        %1661 = vmatprep.subr.mxu0 0.0
        %1662 = vmatpush1.msra.mxu0 0.0
        %1663 = vmatprep.subr.mxu0 0.0
        %1664 = vmatpush1.msra.mxu0 0.0
        %1665 = vmatprep.subr.mxu0 0.0
        %1666 = vmatpush1.msra.mxu0 0.0
        %1667 = vmatprep.subr.mxu0 0.0
        %1668 = vmatpush1.msra.mxu0 0.0
        %1669 = vmatprep.subr.mxu0 0.0
        %1670 = vmatpush1.msra.mxu0 0.0
        %1671 = vmatprep.subr.mxu0 0.0
        %1672 = vmatpush1.msra.mxu0 0.0
        %1673 = vmatprep.subr.mxu0 0.0
        %1674 = vmatpush1.msra.mxu0 0.0
        %1675 = vmatprep.subr.mxu0 0.0
        %1676 = vmatpush1.msra.mxu0 0.0
        %1677 = vmatprep.subr.mxu0 0.0
        %1678 = vmatpush1.msra.mxu0 0.0
        %1679 = vmatprep.subr.mxu0 0.0
        %1680 = vmatpush1.msra.mxu0 0.0
        %1681 = vmatprep.subr.mxu0 0.0
        %1682 = vmatpush1.msra.mxu0 0.0
        %1683 = vmatprep.subr.mxu0 0.0
        %1684 = vmatpush1.msra.mxu0 0.0
        %1685 = vmatprep.subr.mxu0 0.0
        %1686 = vmatpush1.msra.mxu0 0.0
        %1687 = vmatprep.mubr.f32.mxu0 0.0
        %1688 = vmatmul.mubr.f32.gmra.mrb[0].mxu0 %v1615
        %v1689 = vpop.f32.mrb[0].mxu0
        %v1690 = vadd.f32 0.0, %v1689
        %v1691 = vpop.f32.mrb[0].mxu0
        %v1692 = vadd.f32 0.0, %v1691
        %1693 = vdwg.mxu0
        %1694 = vmatprep.subr.mxu0 0.0
        %1695 = vmatpush1.msra.mxu0 %v1621
        %1696 = vmatprep.subr.mxu0 0.0
        %1697 = vmatpush1.msra.mxu0 0.0
        %1698 = vmatprep.subr.mxu0 0.0
        %1699 = vmatpush1.msra.mxu0 0.0
        %1700 = vmatprep.subr.mxu0 0.0
        %1701 = vmatpush1.msra.mxu0 0.0
        %1702 = vmatprep.subr.mxu0 0.0
        %1703 = vmatpush1.msra.mxu0 0.0
        %1704 = vmatprep.subr.mxu0 0.0
        %1705 = vmatpush1.msra.mxu0 0.0
        %1706 = vmatprep.subr.mxu0 0.0
        %1707 = vmatpush1.msra.mxu0 0.0
        %1708 = vmatprep.subr.mxu0 0.0
        %1709 = vmatpush1.msra.mxu0 0.0
        %1710 = vmatprep.subr.mxu0 0.0
        %1711 = vmatpush1.msra.mxu0 0.0
        %1712 = vmatprep.subr.mxu0 0.0
        %1713 = vmatpush1.msra.mxu0 0.0
        %1714 = vmatprep.subr.mxu0 0.0
        %1715 = vmatpush1.msra.mxu0 0.0
        %1716 = vmatprep.subr.mxu0 0.0
        %1717 = vmatpush1.msra.mxu0 0.0
        %1718 = vmatprep.subr.mxu0 0.0
        %1719 = vmatpush1.msra.mxu0 0.0
        %1720 = vmatprep.subr.mxu0 0.0
        %1721 = vmatpush1.msra.mxu0 0.0
        %1722 = vmatprep.subr.mxu0 0.0
        %1723 = vmatpush1.msra.mxu0 0.0
        %1724 = vmatprep.subr.mxu0 0.0
        %1725 = vmatpush1.msra.mxu0 0.0
        %1726 = vmatprep.subr.mxu0 0.0
        %1727 = vmatpush1.msra.mxu0 0.0
        %1728 = vmatprep.subr.mxu0 0.0
        %1729 = vmatpush1.msra.mxu0 0.0
        %1730 = vmatprep.subr.mxu0 0.0
        %1731 = vmatpush1.msra.mxu0 0.0
        %1732 = vmatprep.subr.mxu0 0.0
        %1733 = vmatpush1.msra.mxu0 0.0
        %1734 = vmatprep.subr.mxu0 0.0
        %1735 = vmatpush1.msra.mxu0 0.0
        %1736 = vmatprep.subr.mxu0 0.0
        %1737 = vmatpush1.msra.mxu0 0.0
        %1738 = vmatprep.subr.mxu0 0.0
        %1739 = vmatpush1.msra.mxu0 0.0
        %1740 = vmatprep.subr.mxu0 0.0
        %1741 = vmatpush1.msra.mxu0 0.0
        %1742 = vmatprep.subr.mxu0 0.0
        %1743 = vmatpush1.msra.mxu0 0.0
        %1744 = vmatprep.subr.mxu0 0.0
        %1745 = vmatpush1.msra.mxu0 0.0
        %1746 = vmatprep.subr.mxu0 0.0
        %1747 = vmatpush1.msra.mxu0 0.0
        %1748 = vmatprep.subr.mxu0 0.0
        %1749 = vmatpush1.msra.mxu0 0.0
        %1750 = vmatprep.subr.mxu0 0.0
        %1751 = vmatpush1.msra.mxu0 0.0
        %1752 = vmatprep.subr.mxu0 0.0
        %1753 = vmatpush1.msra.mxu0 0.0
        %1754 = vmatprep.subr.mxu0 0.0
        %1755 = vmatpush1.msra.mxu0 0.0
        %1756 = vmatprep.subr.mxu0 0.0
        %1757 = vmatpush1.msra.mxu0 0.0
        %1758 = vmatprep.mubr.f32.mxu0 0.0
        %1759 = vmatmul.mubr.f32.gmra.mrb[0].mxu0 %v1615
        %v1760 = vpop.f32.mrb[0].mxu0
        %v1761 = vadd.f32 0.0, %v1760
        %v1762 = vpop.f32.mrb[0].mxu0
        %1763 = vdwg.mxu0
        %v1764 = vadd.f32 %v1597, %v1690
        %v1765 = vadd.f32 %v1598, %v1692
        %v1766 = vadd.f32 %v1599, %v1761
        %v1767 = vld [vmem:[%s3] sm:$0xff]
        %1769 = vset.pattern.permute.xlu0 0
        %1770 = vperm.xlu0 %1769, %v1767
        %v1771 = vpop.permute.xlu0 %1770
        %v1773 = vadd.f32 %v1764, %v1771
        %v1774 = vadd.f32 %v1765, %v1771
        %v1775 = vadd.f32 %v1766, %v1771
        %v1776 = vmax.f32 %v1773, 0.0
        %v1777 = vmax.f32 %v1774, 0.0
        %v1778 = vmax.f32 %v1775, 0.0
        %v1779 = vpack.c.bf16 %v1776, %v1776
        %v1780 = vpack.c.bf16 %v1777, %v1777
        %v1781 = vpack.c.bf16 %v1778, %v1778
        %v1785 = vunpack.c.l.b16 %v1779
        %v1786 = vunpack.c.l.b16 %v1780
        %v1787 = vunpack.c.l.b16 %v1781
        %v1788 = vpack.c.b16 %v1786, %v1785
        %v1789 = vpack.c.b16 %v1787, %v1787
        %1792 = vst [vmem:[%s248] sm:$0xff] %v1788
        %1793 = vst [vmem:[%s248 + $0x8] sm:$0xf] %v1789
        %s1794 = sand.u32 %s142, 1
        %s1795 = scalar_lea.sflag [#allocation3], %s1794
        %s1796 = sand.u32 %s142, 1
        %s1797 = smul.addr %s1796, 12
        %s1798 = scalar_lea.vmem [#allocation2], %s1797
        // Predicated region
        $region37: #{tpu_custom_call.1} parent=35 // pred_check
          %p1799 = pneg %p152
        $region38: #{tpu_custom_call.1} parent=35 // pred_check_branch
          %1801 = sbr.rel (%p1799) target = $region40
        $region39: #{tpu_custom_call.1} parent=35 // pred_region
          %s1802 = smul.u32 3, %s23
          %s1804 = ssub.s32 192, 192
          %1805 = vsyncadd %s1795, %s1804
          %s1806 = smul.addr %s22, 3
          %s1807 = sadd.s32 %s1802, %s1806
          %s1808 = smul.addr %s1807, 64
          %s1809 = scalar_lea.hbm %s4, %s1808
          %s1811 = sshll.u32 %s1798, 4
          %s1812 = int_to_ptr.vmem [resolvable:$true] %s1811
          %1814 = dma.vmem_to_hbm [thread:$0]  %s1812, 192, %s1809, %s1795
        $region40: #{tpu_custom_call.1} parent=35 // pred_fallthru
          _
      $region36: #{tpu_custom_call.1} parent=5 // pred_fallthru
        _
      %p1815 = scmp.le.s32.totalorder 2, %s13
      // Predicated region
      $region41: #{tpu_custom_call.1} parent=5 // pred_check
        %p1816 = pneg %p1815
      $region42: #{tpu_custom_call.1} parent=5 // pred_check_branch
        %1818 = sbr.rel (%p1816) target = $region44
      $region43: #{tpu_custom_call.1} parent=5 // pred_region
        %s1819 = ssub.s32 %s13, 2
        // Predicated region
        $region45: #{tpu_custom_call.1} parent=43 // pred_check
          %p1820 = pneg %p158
        $region46: #{tpu_custom_call.1} parent=43 // pred_check_branch
          %1822 = sbr.rel (%p1820) target = $region48
        $region47: #{tpu_custom_call.1} parent=43 // pred_region
          %s1823 = sand.u32 %s143, 1
          %s1824 = scalar_lea.sflag [#allocation3], %s1823
          %s1825 = sand.u32 %s143, 1
          %s1826 = smul.addr %s1825, 12
          %s1827 = scalar_lea.vmem [#allocation2], %s1826
          %1828 = dma.done %s1824, 192
        $region48: #{tpu_custom_call.1} parent=43 // pred_fallthru
          _
      $region44: #{tpu_custom_call.1} parent=5 // pred_fallthru
        _
    $region6: #{tpu_custom_call.1} parent=1 // loop_footer
      %s17 = sadd.s32 1, %s13
    $region7: #{tpu_custom_call.1} parent=1 // loop_footer_branch
      %12 = sbr.rel target = $region3
    $region8: #{tpu_custom_call.1} parent=1 // loop_exit
      _
    %1829 = vsyncpa [#allocation3], 1
    %s1830 = scalar_lea.sflag [#allocation3], 1
    %1831 = vsyncpa %s1830, 1

</llo_original>
